<compile_context>
chip_gen: v7x
topology: tpu7x:2x2x1
jax: 0.10.0
libtpu: 0.0.40
codegen_flags: <defaults>
</compile_context>

<pallas_src>
import jax
import jax.numpy as jnp
from jax.experimental import pallas as pl
from jax.experimental.pallas import tpu as pltpu


def _self_attention_kernel(gamma_ref, xq_ref, xkv_ref,
                           wq_ref, bq_ref, wk_ref, bk_ref, wv_ref, bv_ref,
                           o_ref, qt_s, m_s, l_s, acc_s):
    ki = pl.program_id(2)
    nk = pl.num_programs(2)

    @pl.when(ki == 0)
    def _init():
        # q projection for this query tile, computed once and kept resident.
        xq = xq_ref[0]                                               # (C, TQ) bf16
        q = jnp.dot(wq_ref[...], xq,
                    preferred_element_type=jnp.float32) + bq_ref[...]  # (C8p, TQ) f32
        qt_s[...] = jnp.transpose(q).astype(qt_s.dtype)              # (TQ, C8p) bf16
        m_s[...] = jnp.full_like(m_s[...], -jnp.inf)
        l_s[...] = jnp.zeros_like(l_s[...])
        acc_s[...] = jnp.zeros_like(acc_s[...])

    # key / value projections for this kv tile (1x1 convs == channel matmuls).
    xk = xkv_ref[0]                                                  # (C, TK) bf16
    k = jnp.dot(wk_ref[...], xk,
                preferred_element_type=jnp.float32) + bk_ref[...]    # (C8p, TK) f32
    v = jnp.dot(wv_ref[...], xk,
                preferred_element_type=jnp.float32) + bv_ref[...]    # (C, TK) f32

    # energy tile: s[i, j] = <q_i, k_j>  (contraction over the C/8 channels)
    s = jnp.dot(qt_s[...], k.astype(jnp.bfloat16),
                preferred_element_type=jnp.float32)                  # (TQ, TK) f32

    # online softmax over the kv axis (matches Softmax(dim=-1) on energy).
    m_prev = m_s[...]                                                # (TQ, 1)
    m_new = jnp.maximum(m_prev, jnp.max(s, axis=-1, keepdims=True))
    alpha = jnp.exp(m_prev - m_new)                                  # (TQ, 1)
    p = jnp.exp(s - m_new)                                           # (TQ, TK) f32
    l_s[...] = alpha * l_s[...] + jnp.sum(p, axis=-1, keepdims=True)
    # acc[i, c] += sum_j p[i, j] * v[c, j]
    acc_s[...] = alpha * acc_s[...] + jax.lax.dot_general(
        p.astype(jnp.bfloat16), v.astype(jnp.bfloat16),
        dimension_numbers=(((1,), (1,)), ((), ())),
        preferred_element_type=jnp.float32)                          # (TQ, C)
    m_s[...] = m_new

    @pl.when(ki == nk - 1)
    def _finalize():
        inv_l = pl.reciprocal(l_s[...], approx=True)                 # (TQ, 1)
        attn_out = jnp.transpose(acc_s[...] * inv_l)                 # (C, TQ) f32
        gamma = gamma_ref[0, 0]
        o_ref[0] = gamma * attn_out + xq_ref[0].astype(jnp.float32)


def _pick_tile(n, target):
    if target >= n:
        return n
    for cand in (target, 512, 256, 128):
        if cand <= n and n % cand == 0 and cand % 128 == 0:
            return cand
    return n


def self_attention(x_nchw, params, *, tq=256, tk=256):
    """Forward pass of Self_Attention.  x_nchw: (B, C, W, H) float32."""
    wq, bq, wk, bk, wv, bv, gamma = params
    B, C, W, H = x_nchw.shape
    N = W * H
    c8 = wq.shape[0]
    assert C % 8 == 0 and c8 == C // 8

    tq = _pick_tile(N, tq)
    tk = _pick_tile(N, tk)

    # Channel-major flattening (free reshape, no transpose) + bf16 activations
    # to halve HBM traffic and feed the MXU at full rate.
    xf = x_nchw.reshape(B, C, N).astype(jnp.bfloat16)

    # Pad the C/8 query/key output channels up to a multiple of 8 sublanes.
    # Padded W rows and b entries are zero -> exactly 0 energy contribution.
    c8p = max(8, ((c8 + 7) // 8) * 8)
    wq_p = jnp.zeros((c8p, C), jnp.bfloat16).at[:c8].set(wq.astype(jnp.bfloat16))
    wk_p = jnp.zeros((c8p, C), jnp.bfloat16).at[:c8].set(wk.astype(jnp.bfloat16))
    bq_p = jnp.zeros((c8p, 1), jnp.float32).at[:c8, 0].set(
        bq.reshape(-1).astype(jnp.float32))
    bk_p = jnp.zeros((c8p, 1), jnp.float32).at[:c8, 0].set(
        bk.reshape(-1).astype(jnp.float32))
    wv_b = wv.astype(jnp.bfloat16)
    bv_c = bv.reshape(C, 1).astype(jnp.float32)
    gamma_s = jnp.asarray(gamma, jnp.float32).reshape(1, 1)

    grid = (B, N // tq, N // tk)

    out = pl.pallas_call(
        _self_attention_kernel,
        out_shape=jax.ShapeDtypeStruct((B, C, N), jnp.float32),
        grid_spec=pltpu.PrefetchScalarGridSpec(
            num_scalar_prefetch=0,
            grid=grid,
            in_specs=[
                # gamma scalar lives in SMEM
                pl.BlockSpec((1, 1), lambda b, qi, ki: (0, 0),
                             memory_space=pltpu.SMEM),
                # query-side activation tile (constant over ki -> fetched once)
                pl.BlockSpec((1, C, tq), lambda b, qi, ki: (b, 0, qi)),
                # kv-side activation tile (streamed over ki)
                pl.BlockSpec((1, C, tk), lambda b, qi, ki: (b, 0, ki)),
                # weights / biases: small, constant index -> resident in VMEM
                pl.BlockSpec((c8p, C), lambda b, qi, ki: (0, 0)),
                pl.BlockSpec((c8p, 1), lambda b, qi, ki: (0, 0)),
                pl.BlockSpec((c8p, C), lambda b, qi, ki: (0, 0)),
                pl.BlockSpec((c8p, 1), lambda b, qi, ki: (0, 0)),
                pl.BlockSpec((C, C), lambda b, qi, ki: (0, 0)),
                pl.BlockSpec((C, 1), lambda b, qi, ki: (0, 0)),
            ],
            out_specs=pl.BlockSpec((1, C, tq), lambda b, qi, ki: (b, 0, qi)),
            scratch_shapes=[
                pltpu.VMEM((tq, c8p), jnp.bfloat16),   # q^T for this q tile
                pltpu.VMEM((tq, 1), jnp.float32),      # running max
                pltpu.VMEM((tq, 1), jnp.float32),      # running sum
                pltpu.VMEM((tq, C), jnp.float32),      # unnormalized output
            ],
        ),
        compiler_params=pltpu.CompilerParams(
            dimension_semantics=("parallel", "parallel", "arbitrary"),
            vmem_limit_bytes=32 * 1024 * 1024,
        ),
    )(gamma_s, xf, xf, wq_p, bq_p, wk_p, bk_p, wv_b, bv_c)

    # (B, C, N) -> NCHW is a free reshape (no transpose).
    return out.reshape(B, C, W, H)


def _reference(x_nchw, params):
    """Pure-JAX fp32 reference mirroring the PyTorch forward exactly."""
    wq, bq, wk, bk, wv, bv, gamma = params
    B, C, W, H = x_nchw.shape
    N = W * H
    xf = x_nchw.reshape(B, C, N)                                     # (B, C, N)
    q = jnp.einsum('oc,bcn->bon', wq, xf) + bq.reshape(1, -1, 1)     # (B, C8, N)
    k = jnp.einsum('oc,bcn->bon', wk, xf) + bk.reshape(1, -1, 1)     # (B, C8, N)
    v = jnp.einsum('oc,bcn->bon', wv, xf) + bv.reshape(1, -1, 1)     # (B, C, N)
    energy = jnp.einsum('bci,bcj->bij', q, k)                        # (B, N, N)
    attn = jax.nn.softmax(energy, axis=-1)
    out = jnp.einsum('bcj,bij->bci', v, attn).reshape(B, C, W, H)
    return gamma.reshape(()) * out + x_nchw


def init_params(key, in_dim):
    c8 = in_dim // 8
    k1, k2, k3, k4, k5, k6 = jax.random.split(key, 6)
    wq = 0.1 * jax.random.normal(k1, (c8, in_dim), jnp.float32)
    bq = 0.1 * jax.random.normal(k2, (1, c8), jnp.float32)
    wk = 0.1 * jax.random.normal(k3, (c8, in_dim), jnp.float32)
    bk = 0.1 * jax.random.normal(k4, (1, c8), jnp.float32)
    wv = 0.1 * jax.random.normal(k5, (in_dim, in_dim), jnp.float32)
    bv = 0.1 * jax.random.normal(k6, (1, in_dim), jnp.float32)
    # PyTorch initializes gamma to 0 (output == input); use 0.5 here so the
    # attention path actually contributes to the result.
    gamma = jnp.full((1, 1), 0.5, jnp.float32)
    return (wq, bq, wk, bk, wv, bv, gamma)


if __name__ == "__main__":
    B, C, W, H = 2, 32, 16, 16          # in_dim=32 -> query/key dim 4, N = 256
    key = jax.random.PRNGKey(0)
    kx, kp = jax.random.split(key)
    x = jax.random.normal(kx, (B, C, W, H), jnp.float32)
    params = init_params(kp, C)

    # tq = tk = 128 -> grid (2, 2, 2): exercises q tiling and the online
    # softmax accumulation across kv tiles.
    out = self_attention(x, params, tq=128, tk=128)
    out = jax.block_until_ready(out)

    ref = _reference(x, params)
    assert out.shape == (B, C, W, H)
    # bf16 matmul inputs (fp32 accumulation) -> loosened tolerance vs fp32 ref.
    assert jnp.allclose(out, ref, atol=2e-2, rtol=2e-2), \
        float(jnp.max(jnp.abs(out - ref)))
    print("KERNEL_OK")
</pallas_src>

<mosaic_0001>
module attributes {stable_mosaic.version = 11 : i64} {
  func.func @_self_attention_kernel(%arg0: i32, %arg1: i32, %arg2: i32, %arg3: memref<1x1xf32, #tpu.memory_space<smem>>, %arg4: memref<1x32x128xbf16, #tpu.memory_space<vmem>>, %arg5: memref<1x32x128xbf16, #tpu.memory_space<vmem>>, %arg6: memref<8x32xbf16, #tpu.memory_space<vmem>>, %arg7: memref<8x1xf32, #tpu.memory_space<vmem>>, %arg8: memref<8x32xbf16, #tpu.memory_space<vmem>>, %arg9: memref<8x1xf32, #tpu.memory_space<vmem>>, %arg10: memref<32x32xbf16, #tpu.memory_space<vmem>>, %arg11: memref<32x1xf32, #tpu.memory_space<vmem>>, %arg12: memref<1x32x128xf32, #tpu.memory_space<vmem>>, %arg13: memref<128x8xbf16, #tpu.memory_space<vmem>>, %arg14: memref<128x1xf32, #tpu.memory_space<vmem>>, %arg15: memref<128x1xf32, #tpu.memory_space<vmem>>, %arg16: memref<128x32xf32, #tpu.memory_space<vmem>>) attributes {dimension_semantics = [#tpu.dimension_semantics<parallel>, #tpu.dimension_semantics<parallel>, #tpu.dimension_semantics<arbitrary>], iteration_bounds = array<i64: 2, 2, 2>, scalar_prefetch = 0 : i64, scratch_operands = 4 : i64, tpu.core_type = #tpu.core_type<tc>, window_params = [{transform_indices = @transform_0, window_bounds = array<i64: 1, 1>}, {transform_indices = @transform_1, window_bounds = array<i64: 1, 32, 128>}, {transform_indices = @transform_2, window_bounds = array<i64: 1, 32, 128>}, {pipeline_mode = #tpu.pipeline_mode<synchronous>, transform_indices = @transform_3, window_bounds = array<i64: 8, 32>}, {pipeline_mode = #tpu.pipeline_mode<synchronous>, transform_indices = @transform_4, window_bounds = array<i64: 8, 1>}, {pipeline_mode = #tpu.pipeline_mode<synchronous>, transform_indices = @transform_5, window_bounds = array<i64: 8, 32>}, {pipeline_mode = #tpu.pipeline_mode<synchronous>, transform_indices = @transform_6, window_bounds = array<i64: 8, 1>}, {pipeline_mode = #tpu.pipeline_mode<synchronous>, transform_indices = @transform_7, window_bounds = array<i64: 32, 32>}, {pipeline_mode = #tpu.pipeline_mode<synchronous>, transform_indices = @transform_8, window_bounds = array<i64: 32, 1>}, {transform_indices = @transform_9, window_bounds = array<i64: 1, 32, 128>}]} {
    %c0_i32 = arith.constant 0 : i32
    %0 = arith.cmpi eq, %arg2, %c0_i32 : i32
    %1 = arith.extui %0 : i1 to i32
    %c0_i32_0 = arith.constant 0 : i32
    %2 = arith.cmpi ne, %1, %c0_i32_0 : i32
    scf.if %2 {
      %c0_31 = arith.constant 0 : index
      %c0_32 = arith.constant 0 : index
      %c0_33 = arith.constant 0 : index
      %45 = vector.load %arg4[%c0_31, %c0_32, %c0_33] : memref<1x32x128xbf16, #tpu.memory_space<vmem>>, vector<1x32x128xbf16>
      %46 = vector.shape_cast %45 : vector<1x32x128xbf16> to vector<32x128xbf16>
      %c0_34 = arith.constant 0 : index
      %c0_35 = arith.constant 0 : index
      %47 = vector.load %arg6[%c0_34, %c0_35] : memref<8x32xbf16, #tpu.memory_space<vmem>>, vector<8x32xbf16>
      %cst_36 = arith.constant dense<0.000000e+00> : vector<8x128xf32>
      %48 = tpu.matmul %47, %46, %cst_36 {dimension_numbers = #tpu.dot_dimension_numbers<[1], [0], [0], [1], [0, 0, 1, 1], [], []>} : vector<8x32xbf16>, vector<32x128xbf16>, vector<8x128xf32> -> vector<8x128xf32>
      %c0_37 = arith.constant 0 : index
      %c0_38 = arith.constant 0 : index
      %49 = vector.load %arg7[%c0_37, %c0_38] : memref<8x1xf32, #tpu.memory_space<vmem>>, vector<8x1xf32>
      %50 = vector.broadcast %49 : vector<8x1xf32> to vector<8x128xf32>
      %51 = arith.addf %48, %50 : vector<8x128xf32>
      %52 = tpu.transpose %51, [1, 0] : vector<8x128xf32> -> vector<128x8xf32>
      %53 = arith.truncf %52 : vector<128x8xf32> to vector<128x8xbf16>
      %c0_39 = arith.constant 0 : index
      %c0_40 = arith.constant 0 : index
      %54 = vector.load %arg13[%c0_39, %c0_40] : memref<128x8xbf16, #tpu.memory_space<vmem>>, vector<128x8xbf16>
      tpu.vector_store %arg13[%c0_39, %c0_40], %53 {strides = array<i32>} : memref<128x8xbf16, #tpu.memory_space<vmem>>, vector<128x8xbf16>,
      %cst_41 = arith.constant 0xFF800000 : f32
      %55 = vector.broadcast %cst_41 : f32 to vector<128x1xf32>
      %c0_42 = arith.constant 0 : index
      %c0_43 = arith.constant 0 : index
      %56 = vector.load %arg14[%c0_42, %c0_43] : memref<128x1xf32, #tpu.memory_space<vmem>>, vector<128x1xf32>
      tpu.vector_store %arg14[%c0_42, %c0_43], %55 {strides = array<i32>} : memref<128x1xf32, #tpu.memory_space<vmem>>, vector<128x1xf32>,
      %cst_44 = arith.constant 0.000000e+00 : f32
      %57 = vector.broadcast %cst_44 : f32 to vector<128x1xf32>
      %c0_45 = arith.constant 0 : index
      %c0_46 = arith.constant 0 : index
      %58 = vector.load %arg15[%c0_45, %c0_46] : memref<128x1xf32, #tpu.memory_space<vmem>>, vector<128x1xf32>
      tpu.vector_store %arg15[%c0_45, %c0_46], %57 {strides = array<i32>} : memref<128x1xf32, #tpu.memory_space<vmem>>, vector<128x1xf32>,
      %cst_47 = arith.constant 0.000000e+00 : f32
      %59 = vector.broadcast %cst_47 : f32 to vector<128x32xf32>
      %c0_48 = arith.constant 0 : index
      %c0_49 = arith.constant 0 : index
      %60 = vector.load %arg16[%c0_48, %c0_49] : memref<128x32xf32, #tpu.memory_space<vmem>>, vector<128x32xf32>
      tpu.vector_store %arg16[%c0_48, %c0_49], %59 {strides = array<i32>} : memref<128x32xf32, #tpu.memory_space<vmem>>, vector<128x32xf32>,
    } else {
    }
    %c0 = arith.constant 0 : index
    %c0_1 = arith.constant 0 : index
    %c0_2 = arith.constant 0 : index
    %3 = vector.load %arg5[%c0, %c0_1, %c0_2] : memref<1x32x128xbf16, #tpu.memory_space<vmem>>, vector<1x32x128xbf16>
    %4 = vector.shape_cast %3 : vector<1x32x128xbf16> to vector<32x128xbf16>
    %c0_3 = arith.constant 0 : index
    %c0_4 = arith.constant 0 : index
    %5 = vector.load %arg8[%c0_3, %c0_4] : memref<8x32xbf16, #tpu.memory_space<vmem>>, vector<8x32xbf16>
    %cst = arith.constant dense<0.000000e+00> : vector<8x128xf32>
    %6 = tpu.matmul %5, %4, %cst {dimension_numbers = #tpu.dot_dimension_numbers<[1], [0], [0], [1], [0, 0, 1, 1], [], []>} : vector<8x32xbf16>, vector<32x128xbf16>, vector<8x128xf32> -> vector<8x128xf32>
    %c0_5 = arith.constant 0 : index
    %c0_6 = arith.constant 0 : index
    %7 = vector.load %arg9[%c0_5, %c0_6] : memref<8x1xf32, #tpu.memory_space<vmem>>, vector<8x1xf32>
    %8 = vector.broadcast %7 : vector<8x1xf32> to vector<8x128xf32>
    %9 = arith.addf %6, %8 : vector<8x128xf32>
    %c0_7 = arith.constant 0 : index
    %c0_8 = arith.constant 0 : index
    %10 = vector.load %arg10[%c0_7, %c0_8] : memref<32x32xbf16, #tpu.memory_space<vmem>>, vector<32x32xbf16>
    %cst_9 = arith.constant dense<0.000000e+00> : vector<32x128xf32>
    %11 = tpu.matmul %10, %4, %cst_9 {dimension_numbers = #tpu.dot_dimension_numbers<[1], [0], [0], [1], [0, 0, 1, 1], [], []>} : vector<32x32xbf16>, vector<32x128xbf16>, vector<32x128xf32> -> vector<32x128xf32>
    %c0_10 = arith.constant 0 : index
    %c0_11 = arith.constant 0 : index
    %12 = vector.load %arg11[%c0_10, %c0_11] : memref<32x1xf32, #tpu.memory_space<vmem>>, vector<32x1xf32>
    %13 = vector.broadcast %12 : vector<32x1xf32> to vector<32x128xf32>
    %14 = arith.addf %11, %13 : vector<32x128xf32>
    %c0_12 = arith.constant 0 : index
    %c0_13 = arith.constant 0 : index
    %15 = vector.load %arg13[%c0_12, %c0_13] : memref<128x8xbf16, #tpu.memory_space<vmem>>, vector<128x8xbf16>
    %16 = arith.truncf %9 : vector<8x128xf32> to vector<8x128xbf16>
    %cst_14 = arith.constant dense<0.000000e+00> : vector<128x128xf32>
    %17 = tpu.matmul %15, %16, %cst_14 {dimension_numbers = #tpu.dot_dimension_numbers<[1], [0], [0], [1], [0, 0, 1, 1], [], []>} : vector<128x8xbf16>, vector<8x128xbf16>, vector<128x128xf32> -> vector<128x128xf32>
    %c0_15 = arith.constant 0 : index
    %c0_16 = arith.constant 0 : index
    %18 = vector.load %arg14[%c0_15, %c0_16] : memref<128x1xf32, #tpu.memory_space<vmem>>, vector<128x1xf32>
    %cst_17 = arith.constant dense<0xFF800000> : vector<128xf32>
    %19 = vector.multi_reduction <maximumf>, %17, %cst_17 [1] : vector<128x128xf32> to vector<128xf32>
    %20 = vector.shape_cast %19 : vector<128xf32> to vector<128x1xf32>
    %21 = arith.maximumf %18, %20 : vector<128x1xf32>
    %22 = arith.subf %18, %21 : vector<128x1xf32>
    %23 = math.exp %22 : vector<128x1xf32>
    %24 = vector.broadcast %21 : vector<128x1xf32> to vector<128x128xf32>
    %25 = arith.subf %17, %24 : vector<128x128xf32>
    %26 = math.exp %25 : vector<128x128xf32>
    %c0_18 = arith.constant 0 : index
    %c0_19 = arith.constant 0 : index
    %27 = vector.load %arg15[%c0_18, %c0_19] : memref<128x1xf32, #tpu.memory_space<vmem>>, vector<128x1xf32>
    %28 = arith.mulf %23, %27 : vector<128x1xf32>
    %cst_20 = arith.constant dense<0.000000e+00> : vector<128xf32>
    %29 = vector.multi_reduction <add>, %26, %cst_20 [1] : vector<128x128xf32> to vector<128xf32>
    %30 = vector.shape_cast %29 : vector<128xf32> to vector<128x1xf32>
    %31 = arith.addf %28, %30 : vector<128x1xf32>
    %c0_21 = arith.constant 0 : index
    %c0_22 = arith.constant 0 : index
    %32 = vector.load %arg15[%c0_21, %c0_22] : memref<128x1xf32, #tpu.memory_space<vmem>>, vector<128x1xf32>
    tpu.vector_store %arg15[%c0_21, %c0_22], %31 {strides = array<i32>} : memref<128x1xf32, #tpu.memory_space<vmem>>, vector<128x1xf32>,
    %c0_23 = arith.constant 0 : index
    %c0_24 = arith.constant 0 : index
    %33 = vector.load %arg16[%c0_23, %c0_24] : memref<128x32xf32, #tpu.memory_space<vmem>>, vector<128x32xf32>
    %34 = vector.broadcast %23 : vector<128x1xf32> to vector<128x32xf32>
    %35 = arith.mulf %34, %33 : vector<128x32xf32>
    %36 = arith.truncf %26 : vector<128x128xf32> to vector<128x128xbf16>
    %37 = arith.truncf %14 : vector<32x128xf32> to vector<32x128xbf16>
    %cst_25 = arith.constant dense<0.000000e+00> : vector<128x32xf32>
    %38 = tpu.matmul %36, %37, %cst_25 {dimension_numbers = #tpu.dot_dimension_numbers<[1], [1], [0], [0], [0, 0, 1, 0], [], []>} : vector<128x128xbf16>, vector<32x128xbf16>, vector<128x32xf32> -> vector<128x32xf32>
    %39 = arith.addf %35, %38 : vector<128x32xf32>
    %c0_26 = arith.constant 0 : index
    %c0_27 = arith.constant 0 : index
    %40 = vector.load %arg16[%c0_26, %c0_27] : memref<128x32xf32, #tpu.memory_space<vmem>>, vector<128x32xf32>
    tpu.vector_store %arg16[%c0_26, %c0_27], %39 {strides = array<i32>} : memref<128x32xf32, #tpu.memory_space<vmem>>, vector<128x32xf32>,
    %c0_28 = arith.constant 0 : index
    %c0_29 = arith.constant 0 : index
    %41 = vector.load %arg14[%c0_28, %c0_29] : memref<128x1xf32, #tpu.memory_space<vmem>>, vector<128x1xf32>
    tpu.vector_store %arg14[%c0_28, %c0_29], %21 {strides = array<i32>} : memref<128x1xf32, #tpu.memory_space<vmem>>, vector<128x1xf32>,
    %c1_i32 = arith.constant 1 : i32
    %42 = arith.cmpi eq, %arg2, %c1_i32 : i32
    %43 = arith.extui %42 : i1 to i32
    %c0_i32_30 = arith.constant 0 : i32
    %44 = arith.cmpi ne, %43, %c0_i32_30 : i32
    scf.if %44 {
      %c0_31 = arith.constant 0 : index
      %c0_32 = arith.constant 0 : index
      %45 = vector.load %arg15[%c0_31, %c0_32] : memref<128x1xf32, #tpu.memory_space<vmem>>, vector<128x1xf32>
      %46 = tpu.reciprocal %45 {approx = true} : vector<128x1xf32> -> vector<128x1xf32>
      %c0_33 = arith.constant 0 : index
      %c0_34 = arith.constant 0 : index
      %47 = vector.load %arg16[%c0_33, %c0_34] : memref<128x32xf32, #tpu.memory_space<vmem>>, vector<128x32xf32>
      %48 = vector.broadcast %46 : vector<128x1xf32> to vector<128x32xf32>
      %49 = arith.mulf %47, %48 : vector<128x32xf32>
      %50 = tpu.transpose %49, [1, 0] : vector<128x32xf32> -> vector<32x128xf32>
      %c0_35 = arith.constant 0 : index
      %c0_36 = arith.constant 0 : index
      %51 = memref.load %arg3[%c0_35, %c0_36] : memref<1x1xf32, #tpu.memory_space<smem>>
      %52 = vector.broadcast %51 : f32 to vector<32x128xf32>
      %53 = arith.mulf %52, %50 : vector<32x128xf32>
      %c0_37 = arith.constant 0 : index
      %c0_38 = arith.constant 0 : index
      %c0_39 = arith.constant 0 : index
      %54 = vector.load %arg4[%c0_37, %c0_38, %c0_39] : memref<1x32x128xbf16, #tpu.memory_space<vmem>>, vector<1x32x128xbf16>
      %55 = vector.shape_cast %54 : vector<1x32x128xbf16> to vector<32x128xbf16>
      %56 = arith.extf %55 : vector<32x128xbf16> to vector<32x128xf32>
      %57 = arith.addf %53, %56 : vector<32x128xf32>
      %c0_40 = arith.constant 0 : index
      %c0_41 = arith.constant 0 : index
      %c0_42 = arith.constant 0 : index
      %58 = vector.load %arg12[%c0_40, %c0_41, %c0_42] : memref<1x32x128xf32, #tpu.memory_space<vmem>>, vector<1x32x128xf32>
      %59 = vector.shape_cast %58 : vector<1x32x128xf32> to vector<32x128xf32>
      %60 = vector.shape_cast %57 : vector<32x128xf32> to vector<1x32x128xf32>
      tpu.vector_store %arg12[%c0_40, %c0_41, %c0_42], %60 {strides = array<i32>} : memref<1x32x128xf32, #tpu.memory_space<vmem>>, vector<1x32x128xf32>,
    } else {
    }
    return
  }
  func.func @transform_0(%arg0: i32, %arg1: i32, %arg2: i32) -> (i32, i32) {
    %c0_i32 = arith.constant 0 : i32
    %c0_i32_0 = arith.constant 0 : i32
    %c0_i32_1 = arith.constant 0 : i32
    return %c0_i32, %c0_i32_0 : i32, i32
  }
  func.func @transform_1(%arg0: i32, %arg1: i32, %arg2: i32) -> (i32, i32, i32) {
    %c0_i32 = arith.constant 0 : i32
    %c0_i32_0 = arith.constant 0 : i32
    return %arg0, %c0_i32, %arg1 : i32, i32, i32
  }
  func.func @transform_2(%arg0: i32, %arg1: i32, %arg2: i32) -> (i32, i32, i32) {
    %c0_i32 = arith.constant 0 : i32
    %c0_i32_0 = arith.constant 0 : i32
    return %arg0, %c0_i32, %arg2 : i32, i32, i32
  }
  func.func @transform_3(%arg0: i32, %arg1: i32, %arg2: i32) -> (i32, i32) {
    %c0_i32 = arith.constant 0 : i32
    %c0_i32_0 = arith.constant 0 : i32
    %c0_i32_1 = arith.constant 0 : i32
    return %c0_i32, %c0_i32_0 : i32, i32
  }
  func.func @transform_4(%arg0: i32, %arg1: i32, %arg2: i32) -> (i32, i32) {
    %c0_i32 = arith.constant 0 : i32
    %c0_i32_0 = arith.constant 0 : i32
    %c0_i32_1 = arith.constant 0 : i32
    return %c0_i32, %c0_i32_0 : i32, i32
  }
  func.func @transform_5(%arg0: i32, %arg1: i32, %arg2: i32) -> (i32, i32) {
    %c0_i32 = arith.constant 0 : i32
    %c0_i32_0 = arith.constant 0 : i32
    %c0_i32_1 = arith.constant 0 : i32
    return %c0_i32, %c0_i32_0 : i32, i32
  }
  func.func @transform_6(%arg0: i32, %arg1: i32, %arg2: i32) -> (i32, i32) {
    %c0_i32 = arith.constant 0 : i32
    %c0_i32_0 = arith.constant 0 : i32
    %c0_i32_1 = arith.constant 0 : i32
    return %c0_i32, %c0_i32_0 : i32, i32
  }
  func.func @transform_7(%arg0: i32, %arg1: i32, %arg2: i32) -> (i32, i32) {
    %c0_i32 = arith.constant 0 : i32
    %c0_i32_0 = arith.constant 0 : i32
    %c0_i32_1 = arith.constant 0 : i32
    return %c0_i32, %c0_i32_0 : i32, i32
  }
  func.func @transform_8(%arg0: i32, %arg1: i32, %arg2: i32) -> (i32, i32) {
    %c0_i32 = arith.constant 0 : i32
    %c0_i32_0 = arith.constant 0 : i32
    %c0_i32_1 = arith.constant 0 : i32
    return %c0_i32, %c0_i32_0 : i32, i32
  }
  func.func @transform_9(%arg0: i32, %arg1: i32, %arg2: i32) -> (i32, i32, i32) {
    %c0_i32 = arith.constant 0 : i32
    %c0_i32_0 = arith.constant 0 : i32
    return %arg0, %c0_i32, %arg1 : i32, i32, i32
  }
}

</mosaic_0001>

<llo_original>
// kernel: tpu_custom_call.1
$region0: #{tpu_custom_call.1}
  #allocation0 [shape = 'u32[]', space=smem, size = 0x4, offset = 0x4, fixed_abs, tag = 'smem constant byte address 0x4 - core index']
  #allocation1 [shape = 'u32[144,128]{1,0:T(1,128)}', space=vmem, size = 0x12000, scoped, tag = 'internal scratch']
  #allocation2 [shape = 'bf16[128,8]{1,0:T(16,128)(2,1)}', space=vmem, size = 0x8000, scoped, tag = 'scratch operand']
  #allocation3 [shape = 'f32[128,1]{1,0:T(8,128)}', space=vmem, size = 0x10000, scoped, tag = 'scratch operand']
  #allocation4 [shape = 'f32[128,1]{1,0:T(8,128)}', space=vmem, size = 0x10000, scoped, tag = 'scratch operand']
  #allocation5 [shape = 'f32[128,32]{1,0:T(8,128)}', space=vmem, size = 0x10000, scoped, tag = 'scratch operand']
  #allocation6 [shape = 'f32[1,1]{1,0:T(1,128)S(6)}', space=smem, size = 0x200, scoped, tag = 'scoped memory for tpu_custom_call.1']
  %s0 = inlined_call_operand.<no memory space> [shape: f32[1,1], index: 0, kind: input, shape index: {}]
  %s1 = inlined_call_operand.hbm [shape: bf16[2,32,256], index: 1, kind: input, shape index: {}]
  %s2 = inlined_call_operand.hbm [shape: bf16[2,32,256], index: 2, kind: input, shape index: {}]
  %s3 = inlined_call_operand.vmem [shape: bf16[8,32], index: 3, kind: input, shape index: {}]
  %s4 = inlined_call_operand.vmem [shape: f32[8,1], index: 4, kind: input, shape index: {}]
  %s5 = inlined_call_operand.vmem [shape: bf16[8,32], index: 5, kind: input, shape index: {}]
  %s6 = inlined_call_operand.vmem [shape: f32[8,1], index: 6, kind: input, shape index: {}]
  %s7 = inlined_call_operand.vmem [shape: bf16[32,32], index: 7, kind: input, shape index: {}]
  %s8 = inlined_call_operand.vmem [shape: f32[32,1], index: 8, kind: input, shape index: {}]
  %s9 = inlined_call_operand.hbm [shape: f32[2,32,256], index: 9, kind: output, shape index: {}]
  %s10 = sld [smem:[#allocation0]]
  $region85: #{tpu_custom_call.1} parent=0
    _
  %s12 = ssub.s32 1, %s10
  %s13 = scalar_select 0, %s12, %s10
  %14 = sst [smem:[#allocation6]] %s0
  $region1: #{tpu_custom_call.1} parent=0
    #allocation7 [shape = 'u8[16384]{0}', space=vmem, size = 0x4000, scoped, tag = 'input window, operand 1']
    #allocation8 [shape = 's32[2]{0}', space=sflag, size = 0x8, scoped, tag = 'scoped memory for tpu_custom_call.1']
    #allocation9 [shape = 's32[2]{0}', space=sflag, size = 0x8, scoped, tag = 'scoped memory for tpu_custom_call.1']
    #allocation10 [shape = 'u8[16384]{0}', space=vmem, size = 0x4000, scoped, tag = 'input window, operand 2']
    #allocation11 [shape = 's32[2]{0}', space=sflag, size = 0x8, scoped, tag = 'scoped memory for tpu_custom_call.1']
    #allocation12 [shape = 'u8[32768]{0}', space=vmem, size = 0x8000, scoped, tag = 'output window, operand 0']
    %15 = vsyncpa [#allocation8], 0
    %s16 = scalar_lea.sflag [#allocation8], 1
    %17 = vsyncpa %s16, 0
    %18 = vsyncpa [#allocation11], 0
    %s19 = scalar_lea.sflag [#allocation11], 1
    %20 = vsyncpa %s19, 0
    %21 = vsyncpa [#allocation9], 0
    %s22 = scalar_lea.sflag [#allocation9], 1
    %23 = vsyncpa %s22, 0
    loop: start=0, step=1, limit=10
    $region2: #{tpu_custom_call.1} parent=1 // loop_pre_header
      _
    $region3: #{tpu_custom_call.1} parent=1 // loop_header
      %s25 = sphi 0, %s29
      %p26 = scmp.ge.s32.totalorder %s25, 10
      %s32 = sphi 0, %s51
      %s33 = sphi 0, %s47
      %s34 = sphi 0, %s43
      %s35 = sphi 0, %s32
      %s36 = sphi 0, %s33
      %s37 = sphi 0, %s34
      %s38 = sphi 0, %s35
      %s39 = sphi 0, %s36
      %s40 = sphi 0, %s37
      %s52 = sphi 0, %s52
      %s54 = sphi 0, %s52
      %s55 = sphi 0, %s54
      %s69 = sphi 0, %s55
      %s77 = sphi 0, %s79
      %s80 = sphi 0, %s77
      %s81 = sphi 0, %s80
      %s97 = sphi 0, %s81
      %s105 = sphi 0, %s107
      %s108 = sphi 0, %s105
      %s109 = sphi 0, %s108
      %s125 = sphi 0, %s109
      %s129 = sphi 0, %s129
      %s131 = sphi 0, %s129
      %s132 = sphi 0, %s131
      %s146 = sphi 0, %s132
      %s150 = sphi 0, %s150
      %s152 = sphi 0, %s150
      %s153 = sphi 0, %s152
      %s167 = sphi 0, %s153
      %s171 = sphi 0, %s171
      %s173 = sphi 0, %s171
      %s174 = sphi 0, %s173
      %s188 = sphi 0, %s174
      %s192 = sphi 0, %s192
      %s194 = sphi 0, %s192
      %s195 = sphi 0, %s194
      %s209 = sphi 0, %s195
      %s213 = sphi 0, %s213
      %s215 = sphi 0, %s213
      %s216 = sphi 0, %s215
      %s230 = sphi 0, %s216
      %s234 = sphi 0, %s234
      %s236 = sphi 0, %s234
      %s237 = sphi 0, %s236
      %s251 = sphi 0, %s237
      %s259 = sphi 0, %s261
      %s262 = sphi 0, %s259
      %s263 = sphi 0, %s262
      %s279 = sphi 0, %s263
    $region4: #{tpu_custom_call.1} parent=1 // loop_header_branch
      %28 = sbr.rel (%p26) target = $region8
    $region5: #{tpu_custom_call.1} parent=1 // loop_body
      %s30 = ssub.s32 %s25, 1
      %s31 = ssub.s32 %s25, 2
      %s41 = sadd.s32 1, %s34
      %p42 = scmp.ge.s32.totalorder %s41, 2
      %s43 = scalar_select %p42, 0, %s41
      %s44 = sadd.s32 1, %s33
      %s45 = scalar_select %p42, %s44, %s33
      %p46 = scmp.ge.s32.totalorder %s45, 2
      %s47 = scalar_select %p46, 0, %s45
      %s48 = sadd.s32 1, %s32
      %s49 = scalar_select %p46, %s48, %s32
      %p50 = scmp.ge.s32.totalorder %s49, 2
      %s51 = scalar_select %p50, 0, %s49
      %s53 = sadd.s32 %s52, 1
      %p56 = scmp.eq.s32.totalorder %s25, 7
      %p57 = scmp.ne.s32.totalorder %s52, %s54
      %p58 = scmp.eq.s32.totalorder %s25, 0
      %p59 = por %p57, %p58
      %p60 = scmp.ne.s32.totalorder %s52, %s54
      %p61 = scmp.eq.s32.totalorder %s30, 7
      %p62 = por %p60, %p61
      %p63 = scmp.ne.s32.totalorder %s54, %s55
      %p64 = scmp.eq.s32.totalorder %s30, 0
      %p65 = por %p63, %p64
      %p66 = scmp.ne.s32.totalorder %s54, %s55
      %p67 = scmp.eq.s32.totalorder %s31, 7
      %p68 = por %p66, %p67
      %p70 = scmp.ne.s32.totalorder %s55, %s69
      %p71 = scmp.eq.s32.totalorder %s31, 0
      %p72 = por %p70, %p71
      %s73 = ssub.s32 %s32, %s51
      %s74 = ssub.s32 %s33, %s47
      %s75 = sor.u32 %s73, %s74
      %p76 = scmp.eq.s32.totalorder %s75, 0
      %s78 = sadd.s32 %s77, 1
      %s79 = scalar_select %p76, %s77, %s78
      %p82 = pneg %p76
      %p83 = scmp.eq.s32.totalorder %s25, 7
      %p84 = por %p82, %p83
      %p85 = scmp.ne.s32.totalorder %s77, %s80
      %p86 = scmp.eq.s32.totalorder %s25, 0
      %p87 = por %p85, %p86
      %p88 = scmp.ne.s32.totalorder %s77, %s80
      %p89 = scmp.eq.s32.totalorder %s30, 7
      %p90 = por %p88, %p89
      %p91 = scmp.ne.s32.totalorder %s80, %s81
      %p92 = scmp.eq.s32.totalorder %s30, 0
      %p93 = por %p91, %p92
      %p94 = scmp.ne.s32.totalorder %s80, %s81
      %p95 = scmp.eq.s32.totalorder %s31, 7
      %p96 = por %p94, %p95
      %p98 = scmp.ne.s32.totalorder %s81, %s97
      %p99 = scmp.eq.s32.totalorder %s31, 0
      %p100 = por %p98, %p99
      %s101 = ssub.s32 %s32, %s51
      %s102 = ssub.s32 %s34, %s43
      %s103 = sor.u32 %s101, %s102
      %p104 = scmp.eq.s32.totalorder %s103, 0
      %s106 = sadd.s32 %s105, 1
      %s107 = scalar_select %p104, %s105, %s106
      %p110 = pneg %p104
      %p111 = scmp.eq.s32.totalorder %s25, 7
      %p112 = por %p110, %p111
      %p113 = scmp.ne.s32.totalorder %s105, %s108
      %p114 = scmp.eq.s32.totalorder %s25, 0
      %p115 = por %p113, %p114
      %p116 = scmp.ne.s32.totalorder %s105, %s108
      %p117 = scmp.eq.s32.totalorder %s30, 7
      %p118 = por %p116, %p117
      %p119 = scmp.ne.s32.totalorder %s108, %s109
      %p120 = scmp.eq.s32.totalorder %s30, 0
      %p121 = por %p119, %p120
      %p122 = scmp.ne.s32.totalorder %s108, %s109
      %p123 = scmp.eq.s32.totalorder %s31, 7
      %p124 = por %p122, %p123
      %p126 = scmp.ne.s32.totalorder %s109, %s125
      %p127 = scmp.eq.s32.totalorder %s31, 0
      %p128 = por %p126, %p127
      %s130 = sadd.s32 %s129, 1
      %p133 = scmp.eq.s32.totalorder %s25, 7
      %p134 = scmp.ne.s32.totalorder %s129, %s131
      %p135 = scmp.eq.s32.totalorder %s25, 0
      %p136 = por %p134, %p135
      %p137 = scmp.ne.s32.totalorder %s129, %s131
      %p138 = scmp.eq.s32.totalorder %s30, 7
      %p139 = por %p137, %p138
      %p140 = scmp.ne.s32.totalorder %s131, %s132
      %p141 = scmp.eq.s32.totalorder %s30, 0
      %p142 = por %p140, %p141
      %p143 = scmp.ne.s32.totalorder %s131, %s132
      %p144 = scmp.eq.s32.totalorder %s31, 7
      %p145 = por %p143, %p144
      %p147 = scmp.ne.s32.totalorder %s132, %s146
      %p148 = scmp.eq.s32.totalorder %s31, 0
      %p149 = por %p147, %p148
      %s151 = sadd.s32 %s150, 1
      %p154 = scmp.eq.s32.totalorder %s25, 7
      %p155 = scmp.ne.s32.totalorder %s150, %s152
      %p156 = scmp.eq.s32.totalorder %s25, 0
      %p157 = por %p155, %p156
      %p158 = scmp.ne.s32.totalorder %s150, %s152
      %p159 = scmp.eq.s32.totalorder %s30, 7
      %p160 = por %p158, %p159
      %p161 = scmp.ne.s32.totalorder %s152, %s153
      %p162 = scmp.eq.s32.totalorder %s30, 0
      %p163 = por %p161, %p162
      %p164 = scmp.ne.s32.totalorder %s152, %s153
      %p165 = scmp.eq.s32.totalorder %s31, 7
      %p166 = por %p164, %p165
      %p168 = scmp.ne.s32.totalorder %s153, %s167
      %p169 = scmp.eq.s32.totalorder %s31, 0
      %p170 = por %p168, %p169
      %s172 = sadd.s32 %s171, 1
      %p175 = scmp.eq.s32.totalorder %s25, 7
      %p176 = scmp.ne.s32.totalorder %s171, %s173
      %p177 = scmp.eq.s32.totalorder %s25, 0
      %p178 = por %p176, %p177
      %p179 = scmp.ne.s32.totalorder %s171, %s173
      %p180 = scmp.eq.s32.totalorder %s30, 7
      %p181 = por %p179, %p180
      %p182 = scmp.ne.s32.totalorder %s173, %s174
      %p183 = scmp.eq.s32.totalorder %s30, 0
      %p184 = por %p182, %p183
      %p185 = scmp.ne.s32.totalorder %s173, %s174
      %p186 = scmp.eq.s32.totalorder %s31, 7
      %p187 = por %p185, %p186
      %p189 = scmp.ne.s32.totalorder %s174, %s188
      %p190 = scmp.eq.s32.totalorder %s31, 0
      %p191 = por %p189, %p190
      %s193 = sadd.s32 %s192, 1
      %p196 = scmp.eq.s32.totalorder %s25, 7
      %p197 = scmp.ne.s32.totalorder %s192, %s194
      %p198 = scmp.eq.s32.totalorder %s25, 0
      %p199 = por %p197, %p198
      %p200 = scmp.ne.s32.totalorder %s192, %s194
      %p201 = scmp.eq.s32.totalorder %s30, 7
      %p202 = por %p200, %p201
      %p203 = scmp.ne.s32.totalorder %s194, %s195
      %p204 = scmp.eq.s32.totalorder %s30, 0
      %p205 = por %p203, %p204
      %p206 = scmp.ne.s32.totalorder %s194, %s195
      %p207 = scmp.eq.s32.totalorder %s31, 7
      %p208 = por %p206, %p207
      %p210 = scmp.ne.s32.totalorder %s195, %s209
      %p211 = scmp.eq.s32.totalorder %s31, 0
      %p212 = por %p210, %p211
      %s214 = sadd.s32 %s213, 1
      %p217 = scmp.eq.s32.totalorder %s25, 7
      %p218 = scmp.ne.s32.totalorder %s213, %s215
      %p219 = scmp.eq.s32.totalorder %s25, 0
      %p220 = por %p218, %p219
      %p221 = scmp.ne.s32.totalorder %s213, %s215
      %p222 = scmp.eq.s32.totalorder %s30, 7
      %p223 = por %p221, %p222
      %p224 = scmp.ne.s32.totalorder %s215, %s216
      %p225 = scmp.eq.s32.totalorder %s30, 0
      %p226 = por %p224, %p225
      %p227 = scmp.ne.s32.totalorder %s215, %s216
      %p228 = scmp.eq.s32.totalorder %s31, 7
      %p229 = por %p227, %p228
      %p231 = scmp.ne.s32.totalorder %s216, %s230
      %p232 = scmp.eq.s32.totalorder %s31, 0
      %p233 = por %p231, %p232
      %s235 = sadd.s32 %s234, 1
      %p238 = scmp.eq.s32.totalorder %s25, 7
      %p239 = scmp.ne.s32.totalorder %s234, %s236
      %p240 = scmp.eq.s32.totalorder %s25, 0
      %p241 = por %p239, %p240
      %p242 = scmp.ne.s32.totalorder %s234, %s236
      %p243 = scmp.eq.s32.totalorder %s30, 7
      %p244 = por %p242, %p243
      %p245 = scmp.ne.s32.totalorder %s236, %s237
      %p246 = scmp.eq.s32.totalorder %s30, 0
      %p247 = por %p245, %p246
      %p248 = scmp.ne.s32.totalorder %s236, %s237
      %p249 = scmp.eq.s32.totalorder %s31, 7
      %p250 = por %p248, %p249
      %p252 = scmp.ne.s32.totalorder %s237, %s251
      %p253 = scmp.eq.s32.totalorder %s31, 0
      %p254 = por %p252, %p253
      %s255 = ssub.s32 %s32, %s51
      %s256 = ssub.s32 %s33, %s47
      %s257 = sor.u32 %s255, %s256
      %p258 = scmp.eq.s32.totalorder %s257, 0
      %s260 = sadd.s32 %s259, 1
      %s261 = scalar_select %p258, %s259, %s260
      %p264 = pneg %p258
      %p265 = scmp.eq.s32.totalorder %s25, 7
      %p266 = por %p264, %p265
      %p267 = scmp.ne.s32.totalorder %s259, %s262
      %p268 = scmp.eq.s32.totalorder %s25, 0
      %p269 = por %p267, %p268
      %p270 = scmp.ne.s32.totalorder %s259, %s262
      %p271 = scmp.eq.s32.totalorder %s30, 7
      %p272 = por %p270, %p271
      %p273 = scmp.ne.s32.totalorder %s262, %s263
      %p274 = scmp.eq.s32.totalorder %s30, 0
      %p275 = por %p273, %p274
      %p276 = scmp.ne.s32.totalorder %s262, %s263
      %p277 = scmp.eq.s32.totalorder %s31, 7
      %p278 = por %p276, %p277
      %p280 = scmp.ne.s32.totalorder %s263, %s279
      %p281 = scmp.eq.s32.totalorder %s31, 0
      %p282 = por %p280, %p281
      %p283 = scmp.le.s32.totalorder 1, %s25
      %p284 = scmp.lt.s32.totalorder %s25, 9
      %p285 = pnand %p283, %p284
      %p286 = pneg %p285
      // Predicated region
      $region9: #{tpu_custom_call.1} parent=5 // pred_check
        _
      $region10: #{tpu_custom_call.1} parent=5 // pred_check_branch
        %288 = sbr.rel (%p285) target = $region12
      $region11: #{tpu_custom_call.1} parent=5 // pred_region
        %s289 = ssub.s32 %s25, 1
        // Predicated region
        $region13: #{tpu_custom_call.1} parent=11 // pred_check
          %p290 = pneg %p65
        $region14: #{tpu_custom_call.1} parent=11 // pred_check_branch
          %292 = sbr.rel (%p290) target = $region16
        $region15: #{tpu_custom_call.1} parent=11 // pred_region
          _
        $region16: #{tpu_custom_call.1} parent=11 // pred_fallthru
          _
        // Predicated region
        $region17: #{tpu_custom_call.1} parent=11 // pred_check
          %p293 = pneg %p142
        $region18: #{tpu_custom_call.1} parent=11 // pred_check_branch
          %295 = sbr.rel (%p293) target = $region20
        $region19: #{tpu_custom_call.1} parent=11 // pred_region
          _
        $region20: #{tpu_custom_call.1} parent=11 // pred_fallthru
          _
        // Predicated region
        $region21: #{tpu_custom_call.1} parent=11 // pred_check
          %p296 = pneg %p163
        $region22: #{tpu_custom_call.1} parent=11 // pred_check_branch
          %298 = sbr.rel (%p296) target = $region24
        $region23: #{tpu_custom_call.1} parent=11 // pred_region
          _
        $region24: #{tpu_custom_call.1} parent=11 // pred_fallthru
          _
        // Predicated region
        $region25: #{tpu_custom_call.1} parent=11 // pred_check
          %p299 = pneg %p184
        $region26: #{tpu_custom_call.1} parent=11 // pred_check_branch
          %301 = sbr.rel (%p299) target = $region28
        $region27: #{tpu_custom_call.1} parent=11 // pred_region
          _
        $region28: #{tpu_custom_call.1} parent=11 // pred_fallthru
          _
        // Predicated region
        $region29: #{tpu_custom_call.1} parent=11 // pred_check
          %p302 = pneg %p205
        $region30: #{tpu_custom_call.1} parent=11 // pred_check_branch
          %304 = sbr.rel (%p302) target = $region32
        $region31: #{tpu_custom_call.1} parent=11 // pred_region
          _
        $region32: #{tpu_custom_call.1} parent=11 // pred_fallthru
          _
        // Predicated region
        $region33: #{tpu_custom_call.1} parent=11 // pred_check
          %p305 = pneg %p226
        $region34: #{tpu_custom_call.1} parent=11 // pred_check_branch
          %307 = sbr.rel (%p305) target = $region36
        $region35: #{tpu_custom_call.1} parent=11 // pred_region
          _
        $region36: #{tpu_custom_call.1} parent=11 // pred_fallthru
          _
        // Predicated region
        $region37: #{tpu_custom_call.1} parent=11 // pred_check
          %p308 = pneg %p247
        $region38: #{tpu_custom_call.1} parent=11 // pred_check_branch
          %310 = sbr.rel (%p308) target = $region40
        $region39: #{tpu_custom_call.1} parent=11 // pred_region
          _
        $region40: #{tpu_custom_call.1} parent=11 // pred_fallthru
          _
      $region12: #{tpu_custom_call.1} parent=5 // pred_fallthru
        _
      %p311 = scmp.lt.s32.totalorder %s25, 8
      // Predicated region
      $region41: #{tpu_custom_call.1} parent=5 // pred_check
        %p312 = pneg %p311
      $region42: #{tpu_custom_call.1} parent=5 // pred_check_branch
        %314 = sbr.rel (%p312) target = $region44
      $region43: #{tpu_custom_call.1} parent=5 // pred_region
        // Predicated region
        $region45: #{tpu_custom_call.1} parent=43 // pred_check
          %p315 = pneg %p87
        $region46: #{tpu_custom_call.1} parent=43 // pred_check_branch
          %317 = sbr.rel (%p315) target = $region48
        $region47: #{tpu_custom_call.1} parent=43 // pred_region
          %s318 = sand.u32 %s77, 1
          %s319 = scalar_lea.sflag [#allocation8], %s318
          %s320 = sand.u32 %s77, 1
          %s321 = smul.addr %s320, 16
          %s322 = scalar_lea.vmem [#allocation7], %s321
          %s324 = ssub.s32 256, 256
          %325 = vsyncadd %s319, %s324
          %s326 = smul.addr %s32, 8
          %s327 = sadd.s32 %s33, %s326
          %s328 = smul.addr %s327, 64
          %s329 = scalar_lea.hbm %s1, %s328
          %s330 = sshll.u32 %s322, 4
          %s331 = int_to_ptr.vmem [resolvable:$true] %s330
          %336 = dma.hbm_to_vmem [thread:$0]  %s329, 256, %s331, %s319, 128, 64, 4
        $region48: #{tpu_custom_call.1} parent=43 // pred_fallthru
          _
        // Predicated region
        $region49: #{tpu_custom_call.1} parent=43 // pred_check
          %p337 = pneg %p115
        $region50: #{tpu_custom_call.1} parent=43 // pred_check_branch
          %339 = sbr.rel (%p337) target = $region52
        $region51: #{tpu_custom_call.1} parent=43 // pred_region
          %s340 = sand.u32 %s105, 1
          %s341 = scalar_lea.sflag [#allocation11], %s340
          %s342 = sand.u32 %s105, 1
          %s343 = smul.addr %s342, 16
          %s344 = scalar_lea.vmem [#allocation10], %s343
          %s346 = ssub.s32 256, 256
          %347 = vsyncadd %s341, %s346
          %s348 = smul.addr %s32, 8
          %s349 = sadd.s32 %s34, %s348
          %s350 = smul.addr %s349, 64
          %s351 = scalar_lea.hbm %s2, %s350
          %s352 = sshll.u32 %s344, 4
          %s353 = int_to_ptr.vmem [resolvable:$true] %s352
          %358 = dma.hbm_to_vmem [thread:$0]  %s351, 256, %s353, %s341, 128, 64, 4
        $region52: #{tpu_custom_call.1} parent=43 // pred_fallthru
          _
      $region44: #{tpu_custom_call.1} parent=5 // pred_fallthru
        _
      %p359 = scmp.le.s32.totalorder 1, %s25
      %p360 = scmp.lt.s32.totalorder %s25, 9
      %p361 = pnand %p359, %p360
      %p362 = pneg %p361
      // Predicated region
      $region53: #{tpu_custom_call.1} parent=5 // pred_check
        _
      $region54: #{tpu_custom_call.1} parent=5 // pred_check_branch
        %364 = sbr.rel (%p361) target = $region56
      $region55: #{tpu_custom_call.1} parent=5 // pred_region
        %s365 = ssub.s32 %s25, 1
        %s366 = sand.u32 %s80, 1
        %s367 = scalar_lea.sflag [#allocation8], %s366
        %s368 = sand.u32 %s80, 1
        %s369 = smul.addr %s368, 16
        %s370 = scalar_lea.vmem [#allocation7], %s369
        // Predicated region
        $region57: #{tpu_custom_call.1} parent=55 // pred_check
          %p371 = pneg %p93
        $region58: #{tpu_custom_call.1} parent=55 // pred_check_branch
          %373 = sbr.rel (%p371) target = $region60
        $region59: #{tpu_custom_call.1} parent=55 // pred_region
          %374 = dma.done %s367, 256
        $region60: #{tpu_custom_call.1} parent=55 // pred_fallthru
          _
        %s375 = sand.u32 %s108, 1
        %s376 = scalar_lea.sflag [#allocation11], %s375
        %s377 = sand.u32 %s108, 1
        %s378 = smul.addr %s377, 16
        %s379 = scalar_lea.vmem [#allocation10], %s378
        // Predicated region
        $region61: #{tpu_custom_call.1} parent=55 // pred_check
          %p380 = pneg %p121
        $region62: #{tpu_custom_call.1} parent=55 // pred_check_branch
          %382 = sbr.rel (%p380) target = $region64
        $region63: #{tpu_custom_call.1} parent=55 // pred_region
          %383 = dma.done %s376, 256
        $region64: #{tpu_custom_call.1} parent=55 // pred_fallthru
          _
        %p384 = pneg %p65
        %p385 = pneg %p62
        %s386 = sand.u32 %s80, 1
        %s387 = scalar_lea.sflag [#allocation8], %s386
        %s388 = sand.u32 %s80, 1
        %s389 = smul.addr %s388, 16
        %s390 = scalar_lea.vmem [#allocation7], %s389
        %p391 = pneg %p93
        %p392 = pneg %p90
        %s393 = sand.u32 %s108, 1
        %s394 = scalar_lea.sflag [#allocation11], %s393
        %s395 = sand.u32 %s108, 1
        %s396 = smul.addr %s395, 16
        %s397 = scalar_lea.vmem [#allocation10], %s396
        %p398 = pneg %p121
        %p399 = pneg %p118
        %p400 = pneg %p142
        %p401 = pneg %p139
        %p402 = pneg %p163
        %p403 = pneg %p160
        %p404 = pneg %p184
        %p405 = pneg %p181
        %p406 = pneg %p205
        %p407 = pneg %p202
        %p408 = pneg %p226
        %p409 = pneg %p223
        %p410 = pneg %p247
        %p411 = pneg %p244
        %p412 = pneg %p275
        %p413 = pneg %p272
        %s414 = sand.u32 %s262, 1
        %s415 = scalar_lea.sflag [#allocation9], %s414
        %s416 = sand.u32 %s262, 1
        %s417 = smul.addr %s416, 32
        %s418 = scalar_lea.vmem [#allocation12], %s417
        %p420 = scmp.eq.s32.totalorder %s37, 0
        // Predicated region
        $region65: #{tpu_custom_call.1} parent=55 // pred_check
          %p421 = pneg %p420
        $region66: #{tpu_custom_call.1} parent=55 // pred_check_branch
          %423 = sbr.rel (%p421) target = $region68
        $region67: #{tpu_custom_call.1} parent=55 // pred_region
          %v424 = vld [vmem:[%s370] sm:$0xf]
          %v425 = vld [vmem:[%s370 + $0x4] sm:$0xf]
          %v426 = vld [vmem:[%s370 + $0x8] sm:$0xf]
          %v427 = vld [vmem:[%s370 + $0xc] sm:$0xf]
          %v428 = vld [vmem:[%s3] sm:$0xf]
          %v429 = vld [vmem:[%s4] sm:$0xff]
          %431 = vset.pattern.permute.xlu0 0
          %432 = vperm.xlu0 %431, %v429
          %v433 = vpop.permute.xlu0 %432
          %v439 = vunpack.c.l.b16 %v424
          %v440 = vunpack.c.l.b16 %v425
          %v441 = vunpack.c.l.b16 %v426
          %v442 = vunpack.c.l.b16 %v427
          %v443 = vpack.c.b16 %v440, %v439
          %v444 = vpack.c.b16 %v442, %v441
          %vm447 = vcmask 261120
          %v449 = vsel %vm447, %v428, 0
          %451 = vmatprep.subr.bf16.mxu0 0
          %452 = vmatpush1.bf16.msra.mxu0 %v443
          %453 = vmatprep.subr.bf16.mxu0 0
          %454 = vmatpush1.bf16.msra.mxu0 %v444
          %455 = vmatprep.subr.bf16.mxu0 0
          %456 = vmatpush1.bf16.msra.mxu0 0
          %457 = vmatprep.subr.bf16.mxu0 0
          %458 = vmatpush1.bf16.msra.mxu0 0
          %459 = vmatprep.subr.bf16.mxu0 0
          %460 = vmatpush1.bf16.msra.mxu0 0
          %461 = vmatprep.subr.bf16.mxu0 0
          %462 = vmatpush1.bf16.msra.mxu0 0
          %463 = vmatprep.subr.bf16.mxu0 0
          %464 = vmatpush1.bf16.msra.mxu0 0
          %465 = vmatprep.subr.bf16.mxu0 0
          %466 = vmatpush1.bf16.msra.mxu0 0
          %467 = vmatprep.subr.bf16.mxu0 0
          %468 = vmatpush1.bf16.msra.mxu0 0
          %469 = vmatprep.subr.bf16.mxu0 0
          %470 = vmatpush1.bf16.msra.mxu0 0
          %471 = vmatprep.subr.bf16.mxu0 0
          %472 = vmatpush1.bf16.msra.mxu0 0
          %473 = vmatprep.subr.bf16.mxu0 0
          %474 = vmatpush1.bf16.msra.mxu0 0
          %475 = vmatprep.subr.bf16.mxu0 0
          %476 = vmatpush1.bf16.msra.mxu0 0
          %477 = vmatprep.subr.bf16.mxu0 0
          %478 = vmatpush1.bf16.msra.mxu0 0
          %479 = vmatprep.subr.bf16.mxu0 0
          %480 = vmatpush1.bf16.msra.mxu0 0
          %481 = vmatprep.subr.bf16.mxu0 0
          %482 = vmatpush1.bf16.msra.mxu0 0
          %483 = vmatprep.mubr.bf16.mxu0 0
          %484 = vmatmul.mubr.bf16.gmra.mrb[0].mxu0 %v449
          %v485 = vpop.f32.mrb[0].mxu0
          %v486 = vadd.f32 %v433, %v485
          %v487 = vpop.f32.mrb[0].mxu0
          %v488 = vpop.f32.mrb[0].mxu0
          %v489 = vpop.f32.mrb[0].mxu0
          %490 = vdwg.mxu0
          %491 = vxpose.xlu0.b32.start [1/16] %v486, 128
          %492 = vxpose.xlu0.b32.cont [2/16] 0.0, 128
          %493 = vxpose.xlu0.b32.cont [3/16] 0.0, 128
          %494 = vxpose.xlu0.b32.cont [4/16] 0.0, 128
          %495 = vxpose.xlu0.b32.cont [5/16] 0.0, 128
          %496 = vxpose.xlu0.b32.cont [6/16] 0.0, 128
          %497 = vxpose.xlu0.b32.cont [7/16] 0.0, 128
          %498 = vxpose.xlu0.b32.cont [8/16] 0.0, 128
          %499 = vxpose.xlu0.b32.cont [9/16] 0.0, 128
          %500 = vxpose.xlu0.b32.cont [10/16] 0.0, 128
          %501 = vxpose.xlu0.b32.cont [11/16] 0.0, 128
          %502 = vxpose.xlu0.b32.cont [12/16] 0.0, 128
          %503 = vxpose.xlu0.b32.cont [13/16] 0.0, 128
          %504 = vxpose.xlu0.b32.cont [14/16] 0.0, 128
          %505 = vxpose.xlu0.b32.cont [15/16] 0.0, 128
          %506 = vxpose.xlu0.b32.end [16/16] 0.0, 128
          %v507 = vpop.trf.xlu0
          %v508 = vpop.trf.xlu0
          %v509 = vpop.trf.xlu0
          %v510 = vpop.trf.xlu0
          %v511 = vpop.trf.xlu0
          %v512 = vpop.trf.xlu0
          %v513 = vpop.trf.xlu0
          %v514 = vpop.trf.xlu0
          %v515 = vpop.trf.xlu0
          %v516 = vpop.trf.xlu0
          %v517 = vpop.trf.xlu0
          %v518 = vpop.trf.xlu0
          %v519 = vpop.trf.xlu0
          %v520 = vpop.trf.xlu0
          %v521 = vpop.trf.xlu0
          %v522 = vpop.trf.xlu0
          %v523 = vpack.c.bf16 %v508, %v507
          %v524 = vpack.c.bf16 %v510, %v509
          %v525 = vpack.c.bf16 %v512, %v511
          %v526 = vpack.c.bf16 %v514, %v513
          %v527 = vpack.c.bf16 %v516, %v515
          %v528 = vpack.c.bf16 %v518, %v517
          %v529 = vpack.c.bf16 %v520, %v519
          %v530 = vpack.c.bf16 %v522, %v521
          %vm531 = vcmask 64512
          %532 = vst.msk [vmem:[#allocation2] sm:$0xff] %vm531, %v523
          %533 = vst.msk [vmem:[#allocation2 + $0x8] sm:$0xff] %vm531, %v524
          %534 = vst.msk [vmem:[#allocation2 + $0x10] sm:$0xff] %vm531, %v525
          %535 = vst.msk [vmem:[#allocation2 + $0x18] sm:$0xff] %vm531, %v526
          %536 = vst.msk [vmem:[#allocation2 + $0x20] sm:$0xff] %vm531, %v527
          %537 = vst.msk [vmem:[#allocation2 + $0x28] sm:$0xff] %vm531, %v528
          %538 = vst.msk [vmem:[#allocation2 + $0x30] sm:$0xff] %vm531, %v529
          %539 = vst.msk [vmem:[#allocation2 + $0x38] sm:$0xff] %vm531, %v530
          %vm540 = vcmask 7168
          %541 = vst.msk [vmem:[#allocation3] sm:$0xff] %vm540, -inf
          %542 = vst.msk [vmem:[#allocation3 + $0x8] sm:$0xff] %vm540, -inf
          %543 = vst.msk [vmem:[#allocation3 + $0x10] sm:$0xff] %vm540, -inf
          %544 = vst.msk [vmem:[#allocation3 + $0x18] sm:$0xff] %vm540, -inf
          %545 = vst.msk [vmem:[#allocation3 + $0x20] sm:$0xff] %vm540, -inf
          %546 = vst.msk [vmem:[#allocation3 + $0x28] sm:$0xff] %vm540, -inf
          %547 = vst.msk [vmem:[#allocation3 + $0x30] sm:$0xff] %vm540, -inf
          %548 = vst.msk [vmem:[#allocation3 + $0x38] sm:$0xff] %vm540, -inf
          %549 = vst.msk [vmem:[#allocation3 + $0x40] sm:$0xff] %vm540, -inf
          %550 = vst.msk [vmem:[#allocation3 + $0x48] sm:$0xff] %vm540, -inf
          %551 = vst.msk [vmem:[#allocation3 + $0x50] sm:$0xff] %vm540, -inf
          %552 = vst.msk [vmem:[#allocation3 + $0x58] sm:$0xff] %vm540, -inf
          %553 = vst.msk [vmem:[#allocation3 + $0x60] sm:$0xff] %vm540, -inf
          %554 = vst.msk [vmem:[#allocation3 + $0x68] sm:$0xff] %vm540, -inf
          %555 = vst.msk [vmem:[#allocation3 + $0x70] sm:$0xff] %vm540, -inf
          %556 = vst.msk [vmem:[#allocation3 + $0x78] sm:$0xff] %vm540, -inf
          %557 = vst.msk [vmem:[#allocation4] sm:$0xff] %vm540, 0.0
          %558 = vst.msk [vmem:[#allocation4 + $0x8] sm:$0xff] %vm540, 0.0
          %559 = vst.msk [vmem:[#allocation4 + $0x10] sm:$0xff] %vm540, 0.0
          %560 = vst.msk [vmem:[#allocation4 + $0x18] sm:$0xff] %vm540, 0.0
          %561 = vst.msk [vmem:[#allocation4 + $0x20] sm:$0xff] %vm540, 0.0
          %562 = vst.msk [vmem:[#allocation4 + $0x28] sm:$0xff] %vm540, 0.0
          %563 = vst.msk [vmem:[#allocation4 + $0x30] sm:$0xff] %vm540, 0.0
          %564 = vst.msk [vmem:[#allocation4 + $0x38] sm:$0xff] %vm540, 0.0
          %565 = vst.msk [vmem:[#allocation4 + $0x40] sm:$0xff] %vm540, 0.0
          %566 = vst.msk [vmem:[#allocation4 + $0x48] sm:$0xff] %vm540, 0.0
          %567 = vst.msk [vmem:[#allocation4 + $0x50] sm:$0xff] %vm540, 0.0
          %568 = vst.msk [vmem:[#allocation4 + $0x58] sm:$0xff] %vm540, 0.0
          %569 = vst.msk [vmem:[#allocation4 + $0x60] sm:$0xff] %vm540, 0.0
          %570 = vst.msk [vmem:[#allocation4 + $0x68] sm:$0xff] %vm540, 0.0
          %571 = vst.msk [vmem:[#allocation4 + $0x70] sm:$0xff] %vm540, 0.0
          %572 = vst.msk [vmem:[#allocation4 + $0x78] sm:$0xff] %vm540, 0.0
          %573 = vst.msk [vmem:[#allocation5] sm:$0xff] %vm447, 0.0
          %574 = vst.msk [vmem:[#allocation5 + $0x8] sm:$0xff] %vm447, 0.0
          %575 = vst.msk [vmem:[#allocation5 + $0x10] sm:$0xff] %vm447, 0.0
          %576 = vst.msk [vmem:[#allocation5 + $0x18] sm:$0xff] %vm447, 0.0
          %577 = vst.msk [vmem:[#allocation5 + $0x20] sm:$0xff] %vm447, 0.0
          %578 = vst.msk [vmem:[#allocation5 + $0x28] sm:$0xff] %vm447, 0.0
          %579 = vst.msk [vmem:[#allocation5 + $0x30] sm:$0xff] %vm447, 0.0
          %580 = vst.msk [vmem:[#allocation5 + $0x38] sm:$0xff] %vm447, 0.0
          %581 = vst.msk [vmem:[#allocation5 + $0x40] sm:$0xff] %vm447, 0.0
          %582 = vst.msk [vmem:[#allocation5 + $0x48] sm:$0xff] %vm447, 0.0
          %583 = vst.msk [vmem:[#allocation5 + $0x50] sm:$0xff] %vm447, 0.0
          %584 = vst.msk [vmem:[#allocation5 + $0x58] sm:$0xff] %vm447, 0.0
          %585 = vst.msk [vmem:[#allocation5 + $0x60] sm:$0xff] %vm447, 0.0
          %586 = vst.msk [vmem:[#allocation5 + $0x68] sm:$0xff] %vm447, 0.0
          %587 = vst.msk [vmem:[#allocation5 + $0x70] sm:$0xff] %vm447, 0.0
          %588 = vst.msk [vmem:[#allocation5 + $0x78] sm:$0xff] %vm447, 0.0
        $region68: #{tpu_custom_call.1} parent=55 // pred_fallthru
          _
        %v589 = vld [vmem:[%s379] sm:$0xf]
        %v590 = vld [vmem:[%s379 + $0x4] sm:$0xf]
        %v591 = vld [vmem:[%s379 + $0x8] sm:$0xf]
        %v592 = vld [vmem:[%s379 + $0xc] sm:$0xf]
        %v593 = vld [vmem:[%s5] sm:$0xf]
        %v594 = vld [vmem:[%s6] sm:$0xff]
        %596 = vset.pattern.permute.xlu0 0
        %597 = vperm.xlu0 %596, %v594
        %v598 = vpop.permute.xlu0 %597
        %v604 = vunpack.c.l.b16 %v589
        %v605 = vunpack.c.l.b16 %v590
        %v606 = vunpack.c.l.b16 %v591
        %v607 = vunpack.c.l.b16 %v592
        %v608 = vpack.c.b16 %v605, %v604
        %v609 = vpack.c.b16 %v607, %v606
        %vm612 = vcmask 261120
        %v614 = vsel %vm612, %v593, 0
        %616 = vmatprep.subr.bf16.mxu0 0
        %617 = vmatpush1.bf16.msra.mxu0 %v608
        %618 = vmatprep.subr.bf16.mxu0 0
        %619 = vmatpush1.bf16.msra.mxu0 %v609
        %620 = vmatprep.subr.bf16.mxu0 0
        %621 = vmatpush1.bf16.msra.mxu0 0
        %622 = vmatprep.subr.bf16.mxu0 0
        %623 = vmatpush1.bf16.msra.mxu0 0
        %624 = vmatprep.subr.bf16.mxu0 0
        %625 = vmatpush1.bf16.msra.mxu0 0
        %626 = vmatprep.subr.bf16.mxu0 0
        %627 = vmatpush1.bf16.msra.mxu0 0
        %628 = vmatprep.subr.bf16.mxu0 0
        %629 = vmatpush1.bf16.msra.mxu0 0
        %630 = vmatprep.subr.bf16.mxu0 0
        %631 = vmatpush1.bf16.msra.mxu0 0
        %632 = vmatprep.subr.bf16.mxu0 0
        %633 = vmatpush1.bf16.msra.mxu0 0
        %634 = vmatprep.subr.bf16.mxu0 0
        %635 = vmatpush1.bf16.msra.mxu0 0
        %636 = vmatprep.subr.bf16.mxu0 0
        %637 = vmatpush1.bf16.msra.mxu0 0
        %638 = vmatprep.subr.bf16.mxu0 0
        %639 = vmatpush1.bf16.msra.mxu0 0
        %640 = vmatprep.subr.bf16.mxu0 0
        %641 = vmatpush1.bf16.msra.mxu0 0
        %642 = vmatprep.subr.bf16.mxu0 0
        %643 = vmatpush1.bf16.msra.mxu0 0
        %644 = vmatprep.subr.bf16.mxu0 0
        %645 = vmatpush1.bf16.msra.mxu0 0
        %646 = vmatprep.subr.bf16.mxu0 0
        %647 = vmatpush1.bf16.msra.mxu0 0
        %648 = vmatprep.mubr.bf16.mxu0 0
        %649 = vmatmul.mubr.bf16.gmra.mrb[0].mxu0 %v614
        %v650 = vpop.f32.mrb[0].mxu0
        %v651 = vadd.f32 %v598, %v650
        %v652 = vpop.f32.mrb[0].mxu0
        %v653 = vpop.f32.mrb[0].mxu0
        %v654 = vpop.f32.mrb[0].mxu0
        %655 = vdwg.mxu0
        %v656 = vld [vmem:[%s7] sm:$0xf]
        %v657 = vld [vmem:[%s7 + $0x4] sm:$0xf]
        %v658 = vld [vmem:[%s7 + $0x8] sm:$0xf]
        %v659 = vld [vmem:[%s7 + $0xc] sm:$0xf]
        %v660 = vld [vmem:[%s8] sm:$0xff]
        %v661 = vld [vmem:[%s8 + $0x8] sm:$0xff]
        %v662 = vld [vmem:[%s8 + $0x10] sm:$0xff]
        %v663 = vld [vmem:[%s8 + $0x18] sm:$0xff]
        %665 = vset.pattern.permute.xlu0 0
        %666 = vperm.xlu0 %665, %v660
        %v667 = vpop.permute.xlu0 %666
        %670 = vset.pattern.permute.xlu0 0
        %671 = vperm.xlu0 %670, %v661
        %v672 = vpop.permute.xlu0 %671
        %675 = vset.pattern.permute.xlu0 0
        %676 = vperm.xlu0 %675, %v662
        %v677 = vpop.permute.xlu0 %676
        %680 = vset.pattern.permute.xlu0 0
        %681 = vperm.xlu0 %680, %v663
        %v682 = vpop.permute.xlu0 %681
        %v688 = vunpack.c.l.b16 %v656
        %v689 = vunpack.c.l.b16 %v657
        %v690 = vunpack.c.l.b16 %v658
        %v691 = vunpack.c.l.b16 %v659
        %v692 = vpack.c.b16 %v689, %v688
        %v693 = vpack.c.b16 %v691, %v690
        %v695 = vsel %vm612, %v692, 0
        %v698 = vsel %vm612, %v693, 0
        %700 = vmatprep.subr.bf16.mxu0 0
        %701 = vmatpush1.bf16.msra.mxu0 %v608
        %702 = vmatprep.subr.bf16.mxu0 0
        %703 = vmatpush1.bf16.msra.mxu0 %v609
        %704 = vmatprep.subr.bf16.mxu0 0
        %705 = vmatpush1.bf16.msra.mxu0 0
        %706 = vmatprep.subr.bf16.mxu0 0
        %707 = vmatpush1.bf16.msra.mxu0 0
        %708 = vmatprep.subr.bf16.mxu0 0
        %709 = vmatpush1.bf16.msra.mxu0 0
        %710 = vmatprep.subr.bf16.mxu0 0
        %711 = vmatpush1.bf16.msra.mxu0 0
        %712 = vmatprep.subr.bf16.mxu0 0
        %713 = vmatpush1.bf16.msra.mxu0 0
        %714 = vmatprep.subr.bf16.mxu0 0
        %715 = vmatpush1.bf16.msra.mxu0 0
        %716 = vmatprep.subr.bf16.mxu0 0
        %717 = vmatpush1.bf16.msra.mxu0 0
        %718 = vmatprep.subr.bf16.mxu0 0
        %719 = vmatpush1.bf16.msra.mxu0 0
        %720 = vmatprep.subr.bf16.mxu0 0
        %721 = vmatpush1.bf16.msra.mxu0 0
        %722 = vmatprep.subr.bf16.mxu0 0
        %723 = vmatpush1.bf16.msra.mxu0 0
        %724 = vmatprep.subr.bf16.mxu0 0
        %725 = vmatpush1.bf16.msra.mxu0 0
        %726 = vmatprep.subr.bf16.mxu0 0
        %727 = vmatpush1.bf16.msra.mxu0 0
        %728 = vmatprep.subr.bf16.mxu0 0
        %729 = vmatpush1.bf16.msra.mxu0 0
        %730 = vmatprep.subr.bf16.mxu0 0
        %731 = vmatpush1.bf16.msra.mxu0 0
        %732 = vmatprep.mubr.bf16.mxu0 0
        %733 = vmatmul.mubr.bf16.gmra.mrb[0].mxu0 %v695
        %v734 = vpop.f32.mrb[0].mxu0
        %v735 = vadd.f32 %v667, %v734
        %v736 = vpop.f32.mrb[0].mxu0
        %v737 = vpop.f32.mrb[0].mxu0
        %v738 = vadd.f32 %v672, %v737
        %v739 = vpop.f32.mrb[0].mxu0
        %740 = vmatprep.mubr.bf16.mxu0 0
        %741 = vmatmul.mubr.bf16.gmra.mrb[0].mxu0 %v698
        %v742 = vpop.f32.mrb[0].mxu0
        %v743 = vadd.f32 %v677, %v742
        %v744 = vpop.f32.mrb[0].mxu0
        %v745 = vpop.f32.mrb[0].mxu0
        %v746 = vadd.f32 %v682, %v745
        %v747 = vpop.f32.mrb[0].mxu0
        %748 = vdwg.mxu0
        %v749 = vld [vmem:[#allocation2] sm:$0xff]
        %v750 = vld [vmem:[#allocation2 + $0x8] sm:$0xff]
        %v751 = vld [vmem:[#allocation2 + $0x10] sm:$0xff]
        %v752 = vld [vmem:[#allocation2 + $0x18] sm:$0xff]
        %v753 = vld [vmem:[#allocation2 + $0x20] sm:$0xff]
        %v754 = vld [vmem:[#allocation2 + $0x28] sm:$0xff]
        %v755 = vld [vmem:[#allocation2 + $0x30] sm:$0xff]
        %v756 = vld [vmem:[#allocation2 + $0x38] sm:$0xff]
        %v757 = vpack.c.bf16 %v651, %v651
        %vm758 = vcmask 64512
        %v760 = vsel %vm758, %v749, 0
        %v763 = vsel %vm758, %v750, 0
        %v766 = vsel %vm758, %v751, 0
        %v769 = vsel %vm758, %v752, 0
        %v772 = vsel %vm758, %v753, 0
        %v775 = vsel %vm758, %v754, 0
        %v778 = vsel %vm758, %v755, 0
        %v781 = vsel %vm758, %v756, 0
        %vm783 = vcmask 1043456
        %v785 = vsel %vm783, %v757, 0
        %787 = vmatprep.subr.bf16.mxu0 0
        %788 = vmatpush1.bf16.msra.mxu0 %v785
        %789 = vmatprep.subr.bf16.mxu0 0
        %790 = vmatpush1.bf16.msra.mxu0 0
        %791 = vmatprep.subr.bf16.mxu0 0
        %792 = vmatpush1.bf16.msra.mxu0 0
        %793 = vmatprep.subr.bf16.mxu0 0
        %794 = vmatpush1.bf16.msra.mxu0 0
        %795 = vmatprep.subr.bf16.mxu0 0
        %796 = vmatpush1.bf16.msra.mxu0 0
        %797 = vmatprep.subr.bf16.mxu0 0
        %798 = vmatpush1.bf16.msra.mxu0 0
        %799 = vmatprep.subr.bf16.mxu0 0
        %800 = vmatpush1.bf16.msra.mxu0 0
        %801 = vmatprep.subr.bf16.mxu0 0
        %802 = vmatpush1.bf16.msra.mxu0 0
        %803 = vmatprep.subr.bf16.mxu0 0
        %804 = vmatpush1.bf16.msra.mxu0 0
        %805 = vmatprep.subr.bf16.mxu0 0
        %806 = vmatpush1.bf16.msra.mxu0 0
        %807 = vmatprep.subr.bf16.mxu0 0
        %808 = vmatpush1.bf16.msra.mxu0 0
        %809 = vmatprep.subr.bf16.mxu0 0
        %810 = vmatpush1.bf16.msra.mxu0 0
        %811 = vmatprep.subr.bf16.mxu0 0
        %812 = vmatpush1.bf16.msra.mxu0 0
        %813 = vmatprep.subr.bf16.mxu0 0
        %814 = vmatpush1.bf16.msra.mxu0 0
        %815 = vmatprep.subr.bf16.mxu0 0
        %816 = vmatpush1.bf16.msra.mxu0 0
        %817 = vmatprep.subr.bf16.mxu0 0
        %818 = vmatpush1.bf16.msra.mxu0 0
        %819 = vmatprep.mubr.bf16.mxu0 0
        %820 = vmatmul.mubr.bf16.gmra.mrb[0].mxu0 %v760
        %v821 = vpop.f32.mrb[0].mxu0
        %v822 = vadd.f32 0.0, %v821
        %v823 = vpop.f32.mrb[0].mxu0
        %v824 = vpop.f32.mrb[0].mxu0
        %v825 = vadd.f32 0.0, %v824
        %v826 = vpop.f32.mrb[0].mxu0
        %827 = vmatprep.mubr.bf16.mxu0 0
        %828 = vmatmul.mubr.bf16.gmra.mrb[0].mxu0 %v763
        %v829 = vpop.f32.mrb[0].mxu0
        %v830 = vadd.f32 0.0, %v829
        %v831 = vpop.f32.mrb[0].mxu0
        %v832 = vpop.f32.mrb[0].mxu0
        %v833 = vadd.f32 0.0, %v832
        %v834 = vpop.f32.mrb[0].mxu0
        %835 = vmatprep.mubr.bf16.mxu0 0
        %836 = vmatmul.mubr.bf16.gmra.mrb[0].mxu0 %v766
        %v837 = vpop.f32.mrb[0].mxu0
        %v838 = vadd.f32 0.0, %v837
        %v839 = vpop.f32.mrb[0].mxu0
        %v840 = vpop.f32.mrb[0].mxu0
        %v841 = vadd.f32 0.0, %v840
        %v842 = vpop.f32.mrb[0].mxu0
        %843 = vmatprep.mubr.bf16.mxu0 0
        %844 = vmatmul.mubr.bf16.gmra.mrb[0].mxu0 %v769
        %v845 = vpop.f32.mrb[0].mxu0
        %v846 = vadd.f32 0.0, %v845
        %v847 = vpop.f32.mrb[0].mxu0
        %v848 = vpop.f32.mrb[0].mxu0
        %v849 = vadd.f32 0.0, %v848
        %v850 = vpop.f32.mrb[0].mxu0
        %851 = vmatprep.mubr.bf16.mxu0 0
        %852 = vmatmul.mubr.bf16.gmra.mrb[0].mxu0 %v772
        %v853 = vpop.f32.mrb[0].mxu0
        %v854 = vadd.f32 0.0, %v853
        %v855 = vpop.f32.mrb[0].mxu0
        %v856 = vpop.f32.mrb[0].mxu0
        %v857 = vadd.f32 0.0, %v856
        %v858 = vpop.f32.mrb[0].mxu0
        %859 = vmatprep.mubr.bf16.mxu0 0
        %860 = vmatmul.mubr.bf16.gmra.mrb[0].mxu0 %v775
        %v861 = vpop.f32.mrb[0].mxu0
        %v862 = vadd.f32 0.0, %v861
        %v863 = vpop.f32.mrb[0].mxu0
        %v864 = vpop.f32.mrb[0].mxu0
        %v865 = vadd.f32 0.0, %v864
        %v866 = vpop.f32.mrb[0].mxu0
        %867 = vmatprep.mubr.bf16.mxu0 0
        %868 = vmatmul.mubr.bf16.gmra.mrb[0].mxu0 %v778
        %v869 = vpop.f32.mrb[0].mxu0
        %v870 = vadd.f32 0.0, %v869
        %v871 = vpop.f32.mrb[0].mxu0
        %v872 = vpop.f32.mrb[0].mxu0
        %v873 = vadd.f32 0.0, %v872
        %v874 = vpop.f32.mrb[0].mxu0
        %875 = vmatprep.mubr.bf16.mxu0 0
        %876 = vmatmul.mubr.bf16.gmra.mrb[0].mxu0 %v781
        %v877 = vpop.f32.mrb[0].mxu0
        %v878 = vadd.f32 0.0, %v877
        %v879 = vpop.f32.mrb[0].mxu0
        %v880 = vpop.f32.mrb[0].mxu0
        %v881 = vadd.f32 0.0, %v880
        %v882 = vpop.f32.mrb[0].mxu0
        %883 = vdwg.mxu0
        %v884 = vld [vmem:[#allocation3] sm:$0xff]
        %v885 = vld [vmem:[#allocation3 + $0x8] sm:$0xff]
        %v886 = vld [vmem:[#allocation3 + $0x10] sm:$0xff]
        %v887 = vld [vmem:[#allocation3 + $0x18] sm:$0xff]
        %v888 = vld [vmem:[#allocation3 + $0x20] sm:$0xff]
        %v889 = vld [vmem:[#allocation3 + $0x28] sm:$0xff]
        %v890 = vld [vmem:[#allocation3 + $0x30] sm:$0xff]
        %v891 = vld [vmem:[#allocation3 + $0x38] sm:$0xff]
        %v892 = vld [vmem:[#allocation3 + $0x40] sm:$0xff]
        %v893 = vld [vmem:[#allocation3 + $0x48] sm:$0xff]
        %v894 = vld [vmem:[#allocation3 + $0x50] sm:$0xff]
        %v895 = vld [vmem:[#allocation3 + $0x58] sm:$0xff]
        %v896 = vld [vmem:[#allocation3 + $0x60] sm:$0xff]
        %v897 = vld [vmem:[#allocation3 + $0x68] sm:$0xff]
        %v898 = vld [vmem:[#allocation3 + $0x70] sm:$0xff]
        %v899 = vld [vmem:[#allocation3 + $0x78] sm:$0xff]
        %900 = vmax.xlane.f32.xlu0 %v822
        %v901 = vpop.xlane.xlu0 %900
        %902 = vmax.xlane.f32.xlu0 %v825
        %v903 = vpop.xlane.xlu0 %902
        %904 = vmax.xlane.f32.xlu0 %v830
        %v905 = vpop.xlane.xlu0 %904
        %906 = vmax.xlane.f32.xlu0 %v833
        %v907 = vpop.xlane.xlu0 %906
        %908 = vmax.xlane.f32.xlu0 %v838
        %v909 = vpop.xlane.xlu0 %908
        %910 = vmax.xlane.f32.xlu0 %v841
        %v911 = vpop.xlane.xlu0 %910
        %912 = vmax.xlane.f32.xlu0 %v846
        %v913 = vpop.xlane.xlu0 %912
        %914 = vmax.xlane.f32.xlu0 %v849
        %v915 = vpop.xlane.xlu0 %914
        %916 = vmax.xlane.f32.xlu0 %v854
        %v917 = vpop.xlane.xlu0 %916
        %918 = vmax.xlane.f32.xlu0 %v857
        %v919 = vpop.xlane.xlu0 %918
        %920 = vmax.xlane.f32.xlu0 %v862
        %v921 = vpop.xlane.xlu0 %920
        %922 = vmax.xlane.f32.xlu0 %v865
        %v923 = vpop.xlane.xlu0 %922
        %924 = vmax.xlane.f32.xlu0 %v870
        %v925 = vpop.xlane.xlu0 %924
        %926 = vmax.xlane.f32.xlu0 %v873
        %v927 = vpop.xlane.xlu0 %926
        %928 = vmax.xlane.f32.xlu0 %v878
        %v929 = vpop.xlane.xlu0 %928
        %930 = vmax.xlane.f32.xlu0 %v881
        %v931 = vpop.xlane.xlu0 %930
        %v932 = vmax.f32 %v884, %v901
        %v933 = vmax.f32 %v885, %v903
        %v934 = vmax.f32 %v886, %v905
        %v935 = vmax.f32 %v887, %v907
        %v936 = vmax.f32 %v888, %v909
        %v937 = vmax.f32 %v889, %v911
        %v938 = vmax.f32 %v890, %v913
        %v939 = vmax.f32 %v891, %v915
        %v940 = vmax.f32 %v892, %v917
        %v941 = vmax.f32 %v893, %v919
        %v942 = vmax.f32 %v894, %v921
        %v943 = vmax.f32 %v895, %v923
        %v944 = vmax.f32 %v896, %v925
        %v945 = vmax.f32 %v897, %v927
        %v946 = vmax.f32 %v898, %v929
        %v947 = vmax.f32 %v899, %v931
        %v948 = vsub.f32 %v884, %v932
        %v949 = vsub.f32 %v885, %v933
        %v950 = vsub.f32 %v886, %v934
        %v951 = vsub.f32 %v887, %v935
        %v952 = vsub.f32 %v888, %v936
        %v953 = vsub.f32 %v889, %v937
        %v954 = vsub.f32 %v890, %v938
        %v955 = vsub.f32 %v891, %v939
        %v956 = vsub.f32 %v892, %v940
        %v957 = vsub.f32 %v893, %v941
        %v958 = vsub.f32 %v894, %v942
        %v959 = vsub.f32 %v895, %v943
        %v960 = vsub.f32 %v896, %v944
        %v961 = vsub.f32 %v897, %v945
        %v962 = vsub.f32 %v898, %v946
        %v963 = vsub.f32 %v899, %v947
        %v964 = vmul.f32 %v948, 1.442695
        %v965 = vpow.pop %v964
        %v966 = vmul.f32 %v949, 1.442695
        %v967 = vpow.pop %v966
        %v968 = vmul.f32 %v950, 1.442695
        %v969 = vpow.pop %v968
        %v970 = vmul.f32 %v951, 1.442695
        %v971 = vpow.pop %v970
        %v972 = vmul.f32 %v952, 1.442695
        %v973 = vpow.pop %v972
        %v974 = vmul.f32 %v953, 1.442695
        %v975 = vpow.pop %v974
        %v976 = vmul.f32 %v954, 1.442695
        %v977 = vpow.pop %v976
        %v978 = vmul.f32 %v955, 1.442695
        %v979 = vpow.pop %v978
        %v980 = vmul.f32 %v956, 1.442695
        %v981 = vpow.pop %v980
        %v982 = vmul.f32 %v957, 1.442695
        %v983 = vpow.pop %v982
        %v984 = vmul.f32 %v958, 1.442695
        %v985 = vpow.pop %v984
        %v986 = vmul.f32 %v959, 1.442695
        %v987 = vpow.pop %v986
        %v988 = vmul.f32 %v960, 1.442695
        %v989 = vpow.pop %v988
        %v990 = vmul.f32 %v961, 1.442695
        %v991 = vpow.pop %v990
        %v992 = vmul.f32 %v962, 1.442695
        %v993 = vpow.pop %v992
        %v994 = vmul.f32 %v963, 1.442695
        %v995 = vpow.pop %v994
        %997 = vset.pattern.permute.xlu0 0
        %998 = vperm.xlu0 %997, %v932
        %v999 = vpop.permute.xlu0 %998
        %1002 = vset.pattern.permute.xlu0 0
        %1003 = vperm.xlu0 %1002, %v933
        %v1004 = vpop.permute.xlu0 %1003
        %1007 = vset.pattern.permute.xlu0 0
        %1008 = vperm.xlu0 %1007, %v934
        %v1009 = vpop.permute.xlu0 %1008
        %1012 = vset.pattern.permute.xlu0 0
        %1013 = vperm.xlu0 %1012, %v935
        %v1014 = vpop.permute.xlu0 %1013
        %1017 = vset.pattern.permute.xlu0 0
        %1018 = vperm.xlu0 %1017, %v936
        %v1019 = vpop.permute.xlu0 %1018
        %1022 = vset.pattern.permute.xlu0 0
        %1023 = vperm.xlu0 %1022, %v937
        %v1024 = vpop.permute.xlu0 %1023
        %1027 = vset.pattern.permute.xlu0 0
        %1028 = vperm.xlu0 %1027, %v938
        %v1029 = vpop.permute.xlu0 %1028
        %1032 = vset.pattern.permute.xlu0 0
        %1033 = vperm.xlu0 %1032, %v939
        %v1034 = vpop.permute.xlu0 %1033
        %1037 = vset.pattern.permute.xlu0 0
        %1038 = vperm.xlu0 %1037, %v940
        %v1039 = vpop.permute.xlu0 %1038
        %1042 = vset.pattern.permute.xlu0 0
        %1043 = vperm.xlu0 %1042, %v941
        %v1044 = vpop.permute.xlu0 %1043
        %1047 = vset.pattern.permute.xlu0 0
        %1048 = vperm.xlu0 %1047, %v942
        %v1049 = vpop.permute.xlu0 %1048
        %1052 = vset.pattern.permute.xlu0 0
        %1053 = vperm.xlu0 %1052, %v943
        %v1054 = vpop.permute.xlu0 %1053
        %1057 = vset.pattern.permute.xlu0 0
        %1058 = vperm.xlu0 %1057, %v944
        %v1059 = vpop.permute.xlu0 %1058
        %1062 = vset.pattern.permute.xlu0 0
        %1063 = vperm.xlu0 %1062, %v945
        %v1064 = vpop.permute.xlu0 %1063
        %1067 = vset.pattern.permute.xlu0 0
        %1068 = vperm.xlu0 %1067, %v946
        %v1069 = vpop.permute.xlu0 %1068
        %1072 = vset.pattern.permute.xlu0 0
        %1073 = vperm.xlu0 %1072, %v947
        %v1074 = vpop.permute.xlu0 %1073
        %v1076 = vsub.f32 %v822, %v999
        %v1077 = vsub.f32 %v825, %v1004
        %v1078 = vsub.f32 %v830, %v1009
        %v1079 = vsub.f32 %v833, %v1014
        %v1080 = vsub.f32 %v838, %v1019
        %v1081 = vsub.f32 %v841, %v1024
        %v1082 = vsub.f32 %v846, %v1029
        %v1083 = vsub.f32 %v849, %v1034
        %v1084 = vsub.f32 %v854, %v1039
        %v1085 = vsub.f32 %v857, %v1044
        %v1086 = vsub.f32 %v862, %v1049
        %v1087 = vsub.f32 %v865, %v1054
        %v1088 = vsub.f32 %v870, %v1059
        %v1089 = vsub.f32 %v873, %v1064
        %v1090 = vsub.f32 %v878, %v1069
        %v1091 = vsub.f32 %v881, %v1074
        %v1092 = vmul.f32 %v1076, 1.442695
        %v1093 = vpow.pop %v1092
        %v1094 = vmul.f32 %v1077, 1.442695
        %v1095 = vpow.pop %v1094
        %v1096 = vmul.f32 %v1078, 1.442695
        %v1097 = vpow.pop %v1096
        %v1098 = vmul.f32 %v1079, 1.442695
        %v1099 = vpow.pop %v1098
        %v1100 = vmul.f32 %v1080, 1.442695
        %v1101 = vpow.pop %v1100
        %v1102 = vmul.f32 %v1081, 1.442695
        %v1103 = vpow.pop %v1102
        %v1104 = vmul.f32 %v1082, 1.442695
        %v1105 = vpow.pop %v1104
        %v1106 = vmul.f32 %v1083, 1.442695
        %v1107 = vpow.pop %v1106
        %v1108 = vmul.f32 %v1084, 1.442695
        %v1109 = vpow.pop %v1108
        %v1110 = vmul.f32 %v1085, 1.442695
        %v1111 = vpow.pop %v1110
        %v1112 = vmul.f32 %v1086, 1.442695
        %v1113 = vpow.pop %v1112
        %v1114 = vmul.f32 %v1087, 1.442695
        %v1115 = vpow.pop %v1114
        %v1116 = vmul.f32 %v1088, 1.442695
        %v1117 = vpow.pop %v1116
        %v1118 = vmul.f32 %v1089, 1.442695
        %v1119 = vpow.pop %v1118
        %v1120 = vmul.f32 %v1090, 1.442695
        %v1121 = vpow.pop %v1120
        %v1122 = vmul.f32 %v1091, 1.442695
        %v1123 = vpow.pop %v1122
        %v1124 = vld [vmem:[#allocation4] sm:$0xff]
        %v1125 = vld [vmem:[#allocation4 + $0x8] sm:$0xff]
        %v1126 = vld [vmem:[#allocation4 + $0x10] sm:$0xff]
        %v1127 = vld [vmem:[#allocation4 + $0x18] sm:$0xff]
        %v1128 = vld [vmem:[#allocation4 + $0x20] sm:$0xff]
        %v1129 = vld [vmem:[#allocation4 + $0x28] sm:$0xff]
        %v1130 = vld [vmem:[#allocation4 + $0x30] sm:$0xff]
        %v1131 = vld [vmem:[#allocation4 + $0x38] sm:$0xff]
        %v1132 = vld [vmem:[#allocation4 + $0x40] sm:$0xff]
        %v1133 = vld [vmem:[#allocation4 + $0x48] sm:$0xff]
        %v1134 = vld [vmem:[#allocation4 + $0x50] sm:$0xff]
        %v1135 = vld [vmem:[#allocation4 + $0x58] sm:$0xff]
        %v1136 = vld [vmem:[#allocation4 + $0x60] sm:$0xff]
        %v1137 = vld [vmem:[#allocation4 + $0x68] sm:$0xff]
        %v1138 = vld [vmem:[#allocation4 + $0x70] sm:$0xff]
        %v1139 = vld [vmem:[#allocation4 + $0x78] sm:$0xff]
        %v1140 = vmul.f32 %v965, %v1124
        %v1141 = vmul.f32 %v967, %v1125
        %v1142 = vmul.f32 %v969, %v1126
        %v1143 = vmul.f32 %v971, %v1127
        %v1144 = vmul.f32 %v973, %v1128
        %v1145 = vmul.f32 %v975, %v1129
        %v1146 = vmul.f32 %v977, %v1130
        %v1147 = vmul.f32 %v979, %v1131
        %v1148 = vmul.f32 %v981, %v1132
        %v1149 = vmul.f32 %v983, %v1133
        %v1150 = vmul.f32 %v985, %v1134
        %v1151 = vmul.f32 %v987, %v1135
        %v1152 = vmul.f32 %v989, %v1136
        %v1153 = vmul.f32 %v991, %v1137
        %v1154 = vmul.f32 %v993, %v1138
        %v1155 = vmul.f32 %v995, %v1139
        %1156 = vadd.xlane.f32.xlu0 %v1093
        %v1157 = vpop.xlane.xlu0 %1156
        %1158 = vadd.xlane.f32.xlu0 %v1095
        %v1159 = vpop.xlane.xlu0 %1158
        %1160 = vadd.xlane.f32.xlu0 %v1097
        %v1161 = vpop.xlane.xlu0 %1160
        %1162 = vadd.xlane.f32.xlu0 %v1099
        %v1163 = vpop.xlane.xlu0 %1162
        %1164 = vadd.xlane.f32.xlu0 %v1101
        %v1165 = vpop.xlane.xlu0 %1164
        %1166 = vadd.xlane.f32.xlu0 %v1103
        %v1167 = vpop.xlane.xlu0 %1166
        %1168 = vadd.xlane.f32.xlu0 %v1105
        %v1169 = vpop.xlane.xlu0 %1168
        %1170 = vadd.xlane.f32.xlu0 %v1107
        %v1171 = vpop.xlane.xlu0 %1170
        %1172 = vadd.xlane.f32.xlu0 %v1109
        %v1173 = vpop.xlane.xlu0 %1172
        %1174 = vadd.xlane.f32.xlu0 %v1111
        %v1175 = vpop.xlane.xlu0 %1174
        %1176 = vadd.xlane.f32.xlu0 %v1113
        %v1177 = vpop.xlane.xlu0 %1176
        %1178 = vadd.xlane.f32.xlu0 %v1115
        %v1179 = vpop.xlane.xlu0 %1178
        %1180 = vadd.xlane.f32.xlu0 %v1117
        %v1181 = vpop.xlane.xlu0 %1180
        %1182 = vadd.xlane.f32.xlu0 %v1119
        %v1183 = vpop.xlane.xlu0 %1182
        %1184 = vadd.xlane.f32.xlu0 %v1121
        %v1185 = vpop.xlane.xlu0 %1184
        %1186 = vadd.xlane.f32.xlu0 %v1123
        %v1187 = vpop.xlane.xlu0 %1186
        %v1188 = vadd.f32 %v1140, %v1157
        %v1189 = vadd.f32 %v1141, %v1159
        %v1190 = vadd.f32 %v1142, %v1161
        %v1191 = vadd.f32 %v1143, %v1163
        %v1192 = vadd.f32 %v1144, %v1165
        %v1193 = vadd.f32 %v1145, %v1167
        %v1194 = vadd.f32 %v1146, %v1169
        %v1195 = vadd.f32 %v1147, %v1171
        %v1196 = vadd.f32 %v1148, %v1173
        %v1197 = vadd.f32 %v1149, %v1175
        %v1198 = vadd.f32 %v1150, %v1177
        %v1199 = vadd.f32 %v1151, %v1179
        %v1200 = vadd.f32 %v1152, %v1181
        %v1201 = vadd.f32 %v1153, %v1183
        %v1202 = vadd.f32 %v1154, %v1185
        %v1203 = vadd.f32 %v1155, %v1187
        %vm1204 = vcmask 7168
        %1205 = vst.msk [vmem:[#allocation4] sm:$0xff] %vm1204, %v1188
        %1206 = vst.msk [vmem:[#allocation4 + $0x8] sm:$0xff] %vm1204, %v1189
        %1207 = vst.msk [vmem:[#allocation4 + $0x10] sm:$0xff] %vm1204, %v1190
        %1208 = vst.msk [vmem:[#allocation4 + $0x18] sm:$0xff] %vm1204, %v1191
        %1209 = vst.msk [vmem:[#allocation4 + $0x20] sm:$0xff] %vm1204, %v1192
        %1210 = vst.msk [vmem:[#allocation4 + $0x28] sm:$0xff] %vm1204, %v1193
        %1211 = vst.msk [vmem:[#allocation4 + $0x30] sm:$0xff] %vm1204, %v1194
        %1212 = vst.msk [vmem:[#allocation4 + $0x38] sm:$0xff] %vm1204, %v1195
        %1213 = vst.msk [vmem:[#allocation4 + $0x40] sm:$0xff] %vm1204, %v1196
        %1214 = vst.msk [vmem:[#allocation4 + $0x48] sm:$0xff] %vm1204, %v1197
        %1215 = vst.msk [vmem:[#allocation4 + $0x50] sm:$0xff] %vm1204, %v1198
        %1216 = vst.msk [vmem:[#allocation4 + $0x58] sm:$0xff] %vm1204, %v1199
        %1217 = vst.msk [vmem:[#allocation4 + $0x60] sm:$0xff] %vm1204, %v1200
        %1218 = vst.msk [vmem:[#allocation4 + $0x68] sm:$0xff] %vm1204, %v1201
        %1219 = vst.msk [vmem:[#allocation4 + $0x70] sm:$0xff] %vm1204, %v1202
        %1220 = vst.msk [vmem:[#allocation4 + $0x78] sm:$0xff] %vm1204, %v1203
        %v1221 = vld [vmem:[#allocation5] sm:$0xff]
        %v1222 = vld [vmem:[#allocation5 + $0x8] sm:$0xff]
        %v1223 = vld [vmem:[#allocation5 + $0x10] sm:$0xff]
        %v1224 = vld [vmem:[#allocation5 + $0x18] sm:$0xff]
        %v1225 = vld [vmem:[#allocation5 + $0x20] sm:$0xff]
        %v1226 = vld [vmem:[#allocation5 + $0x28] sm:$0xff]
        %v1227 = vld [vmem:[#allocation5 + $0x30] sm:$0xff]
        %v1228 = vld [vmem:[#allocation5 + $0x38] sm:$0xff]
        %v1229 = vld [vmem:[#allocation5 + $0x40] sm:$0xff]
        %v1230 = vld [vmem:[#allocation5 + $0x48] sm:$0xff]
        %v1231 = vld [vmem:[#allocation5 + $0x50] sm:$0xff]
        %v1232 = vld [vmem:[#allocation5 + $0x58] sm:$0xff]
        %v1233 = vld [vmem:[#allocation5 + $0x60] sm:$0xff]
        %v1234 = vld [vmem:[#allocation5 + $0x68] sm:$0xff]
        %v1235 = vld [vmem:[#allocation5 + $0x70] sm:$0xff]
        %v1236 = vld [vmem:[#allocation5 + $0x78] sm:$0xff]
        %1238 = vset.pattern.permute.xlu0 0
        %1239 = vperm.xlu0 %1238, %v965
        %v1240 = vpop.permute.xlu0 %1239
        %1243 = vset.pattern.permute.xlu0 0
        %1244 = vperm.xlu0 %1243, %v967
        %v1245 = vpop.permute.xlu0 %1244
        %1248 = vset.pattern.permute.xlu0 0
        %1249 = vperm.xlu0 %1248, %v969
        %v1250 = vpop.permute.xlu0 %1249
        %1253 = vset.pattern.permute.xlu0 0
        %1254 = vperm.xlu0 %1253, %v971
        %v1255 = vpop.permute.xlu0 %1254
        %1258 = vset.pattern.permute.xlu0 0
        %1259 = vperm.xlu0 %1258, %v973
        %v1260 = vpop.permute.xlu0 %1259
        %1263 = vset.pattern.permute.xlu0 0
        %1264 = vperm.xlu0 %1263, %v975
        %v1265 = vpop.permute.xlu0 %1264
        %1268 = vset.pattern.permute.xlu0 0
        %1269 = vperm.xlu0 %1268, %v977
        %v1270 = vpop.permute.xlu0 %1269
        %1273 = vset.pattern.permute.xlu0 0
        %1274 = vperm.xlu0 %1273, %v979
        %v1275 = vpop.permute.xlu0 %1274
        %1278 = vset.pattern.permute.xlu0 0
        %1279 = vperm.xlu0 %1278, %v981
        %v1280 = vpop.permute.xlu0 %1279
        %1283 = vset.pattern.permute.xlu0 0
        %1284 = vperm.xlu0 %1283, %v983
        %v1285 = vpop.permute.xlu0 %1284
        %1288 = vset.pattern.permute.xlu0 0
        %1289 = vperm.xlu0 %1288, %v985
        %v1290 = vpop.permute.xlu0 %1289
        %1293 = vset.pattern.permute.xlu0 0
        %1294 = vperm.xlu0 %1293, %v987
        %v1295 = vpop.permute.xlu0 %1294
        %1298 = vset.pattern.permute.xlu0 0
        %1299 = vperm.xlu0 %1298, %v989
        %v1300 = vpop.permute.xlu0 %1299
        %1303 = vset.pattern.permute.xlu0 0
        %1304 = vperm.xlu0 %1303, %v991
        %v1305 = vpop.permute.xlu0 %1304
        %1308 = vset.pattern.permute.xlu0 0
        %1309 = vperm.xlu0 %1308, %v993
        %v1310 = vpop.permute.xlu0 %1309
        %1313 = vset.pattern.permute.xlu0 0
        %1314 = vperm.xlu0 %1313, %v995
        %v1315 = vpop.permute.xlu0 %1314
        %v1317 = vmul.f32 %v1240, %v1221
        %v1318 = vmul.f32 %v1245, %v1222
        %v1319 = vmul.f32 %v1250, %v1223
        %v1320 = vmul.f32 %v1255, %v1224
        %v1321 = vmul.f32 %v1260, %v1225
        %v1322 = vmul.f32 %v1265, %v1226
        %v1323 = vmul.f32 %v1270, %v1227
        %v1324 = vmul.f32 %v1275, %v1228
        %v1325 = vmul.f32 %v1280, %v1229
        %v1326 = vmul.f32 %v1285, %v1230
        %v1327 = vmul.f32 %v1290, %v1231
        %v1328 = vmul.f32 %v1295, %v1232
        %v1329 = vmul.f32 %v1300, %v1233
        %v1330 = vmul.f32 %v1305, %v1234
        %v1331 = vmul.f32 %v1310, %v1235
        %v1332 = vmul.f32 %v1315, %v1236
        %v1333 = vpack.c.bf16 %v1095, %v1093
        %v1334 = vpack.c.bf16 %v1099, %v1097
        %v1335 = vpack.c.bf16 %v1103, %v1101
        %v1336 = vpack.c.bf16 %v1107, %v1105
        %v1337 = vpack.c.bf16 %v1111, %v1109
        %v1338 = vpack.c.bf16 %v1115, %v1113
        %v1339 = vpack.c.bf16 %v1119, %v1117
        %v1340 = vpack.c.bf16 %v1123, %v1121
        %v1341 = vpack.c.bf16 %v738, %v735
        %v1342 = vpack.c.bf16 %v746, %v743
        %1343 = vmatprep.subr.bf16.mxu0 0
        %1344 = vmatpush1.bf16.xpose.msra.mxu0 %v1341
        %1345 = vmatprep.subr.bf16.mxu0 0
        %1346 = vmatpush1.bf16.xpose.msra.mxu0 %v1342
        %1347 = vmatprep.subr.bf16.mxu0 0
        %1348 = vmatpush1.bf16.xpose.msra.mxu0 0
        %1349 = vmatprep.subr.bf16.mxu0 0
        %1350 = vmatpush1.bf16.xpose.msra.mxu0 0
        %1351 = vmatprep.subr.bf16.mxu0 0
        %1352 = vmatpush1.bf16.xpose.msra.mxu0 0
        %1353 = vmatprep.subr.bf16.mxu0 0
        %1354 = vmatpush1.bf16.xpose.msra.mxu0 0
        %1355 = vmatprep.subr.bf16.mxu0 0
        %1356 = vmatpush1.bf16.xpose.msra.mxu0 0
        %1357 = vmatprep.subr.bf16.mxu0 0
        %1358 = vmatpush1.bf16.xpose.msra.mxu0 0
        %1359 = vmatprep.subr.bf16.mxu0 0
        %1360 = vmatpush1.bf16.xpose.msra.mxu0 0
        %1361 = vmatprep.subr.bf16.mxu0 0
        %1362 = vmatpush1.bf16.xpose.msra.mxu0 0
        %1363 = vmatprep.subr.bf16.mxu0 0
        %1364 = vmatpush1.bf16.xpose.msra.mxu0 0
        %1365 = vmatprep.subr.bf16.mxu0 0
        %1366 = vmatpush1.bf16.xpose.msra.mxu0 0
        %1367 = vmatprep.subr.bf16.mxu0 0
        %1368 = vmatpush1.bf16.xpose.msra.mxu0 0
        %1369 = vmatprep.subr.bf16.mxu0 0
        %1370 = vmatpush1.bf16.xpose.msra.mxu0 0
        %1371 = vmatprep.subr.bf16.mxu0 0
        %1372 = vmatpush1.bf16.xpose.msra.mxu0 0
        %1373 = vmatprep.subr.bf16.mxu0 0
        %1374 = vmatpush1.bf16.xpose.msra.mxu0 0
        %1375 = vmatprep.mubr.bf16.mxu0 0
        %1376 = vmatmul.mubr.bf16.gmra.mrb[0].mxu0 %v1333
        %v1377 = vpop.f32.mrb[0].mxu0
        %v1378 = vadd.f32 0.0, %v1377
        %v1379 = vpop.f32.mrb[0].mxu0
        %v1380 = vpop.f32.mrb[0].mxu0
        %v1381 = vadd.f32 0.0, %v1380
        %v1382 = vpop.f32.mrb[0].mxu0
        %1383 = vmatprep.mubr.bf16.mxu0 0
        %1384 = vmatmul.mubr.bf16.gmra.mrb[0].mxu0 %v1334
        %v1385 = vpop.f32.mrb[0].mxu0
        %v1386 = vadd.f32 0.0, %v1385
        %v1387 = vpop.f32.mrb[0].mxu0
        %v1388 = vpop.f32.mrb[0].mxu0
        %v1389 = vadd.f32 0.0, %v1388
        %v1390 = vpop.f32.mrb[0].mxu0
        %1391 = vmatprep.mubr.bf16.mxu0 0
        %1392 = vmatmul.mubr.bf16.gmra.mrb[0].mxu0 %v1335
        %v1393 = vpop.f32.mrb[0].mxu0
        %v1394 = vadd.f32 0.0, %v1393
        %v1395 = vpop.f32.mrb[0].mxu0
        %v1396 = vpop.f32.mrb[0].mxu0
        %v1397 = vadd.f32 0.0, %v1396
        %v1398 = vpop.f32.mrb[0].mxu0
        %1399 = vmatprep.mubr.bf16.mxu0 0
        %1400 = vmatmul.mubr.bf16.gmra.mrb[0].mxu0 %v1336
        %v1401 = vpop.f32.mrb[0].mxu0
        %v1402 = vadd.f32 0.0, %v1401
        %v1403 = vpop.f32.mrb[0].mxu0
        %v1404 = vpop.f32.mrb[0].mxu0
        %v1405 = vadd.f32 0.0, %v1404
        %v1406 = vpop.f32.mrb[0].mxu0
        %1407 = vmatprep.mubr.bf16.mxu0 0
        %1408 = vmatmul.mubr.bf16.gmra.mrb[0].mxu0 %v1337
        %v1409 = vpop.f32.mrb[0].mxu0
        %v1410 = vadd.f32 0.0, %v1409
        %v1411 = vpop.f32.mrb[0].mxu0
        %v1412 = vpop.f32.mrb[0].mxu0
        %v1413 = vadd.f32 0.0, %v1412
        %v1414 = vpop.f32.mrb[0].mxu0
        %1415 = vmatprep.mubr.bf16.mxu0 0
        %1416 = vmatmul.mubr.bf16.gmra.mrb[0].mxu0 %v1338
        %v1417 = vpop.f32.mrb[0].mxu0
        %v1418 = vadd.f32 0.0, %v1417
        %v1419 = vpop.f32.mrb[0].mxu0
        %v1420 = vpop.f32.mrb[0].mxu0
        %v1421 = vadd.f32 0.0, %v1420
        %v1422 = vpop.f32.mrb[0].mxu0
        %1423 = vmatprep.mubr.bf16.mxu0 0
        %1424 = vmatmul.mubr.bf16.gmra.mrb[0].mxu0 %v1339
        %v1425 = vpop.f32.mrb[0].mxu0
        %v1426 = vadd.f32 0.0, %v1425
        %v1427 = vpop.f32.mrb[0].mxu0
        %v1428 = vpop.f32.mrb[0].mxu0
        %v1429 = vadd.f32 0.0, %v1428
        %v1430 = vpop.f32.mrb[0].mxu0
        %1431 = vmatprep.mubr.bf16.mxu0 0
        %1432 = vmatmul.mubr.bf16.gmra.mrb[0].mxu0 %v1340
        %v1433 = vpop.f32.mrb[0].mxu0
        %v1434 = vadd.f32 0.0, %v1433
        %v1435 = vpop.f32.mrb[0].mxu0
        %v1436 = vpop.f32.mrb[0].mxu0
        %v1437 = vadd.f32 0.0, %v1436
        %v1438 = vpop.f32.mrb[0].mxu0
        %1439 = vdwg.mxu0
        %v1440 = vadd.f32 %v1317, %v1378
        %v1441 = vadd.f32 %v1318, %v1381
        %v1442 = vadd.f32 %v1319, %v1386
        %v1443 = vadd.f32 %v1320, %v1389
        %v1444 = vadd.f32 %v1321, %v1394
        %v1445 = vadd.f32 %v1322, %v1397
        %v1446 = vadd.f32 %v1323, %v1402
        %v1447 = vadd.f32 %v1324, %v1405
        %v1448 = vadd.f32 %v1325, %v1410
        %v1449 = vadd.f32 %v1326, %v1413
        %v1450 = vadd.f32 %v1327, %v1418
        %v1451 = vadd.f32 %v1328, %v1421
        %v1452 = vadd.f32 %v1329, %v1426
        %v1453 = vadd.f32 %v1330, %v1429
        %v1454 = vadd.f32 %v1331, %v1434
        %v1455 = vadd.f32 %v1332, %v1437
        %1456 = vst.msk [vmem:[#allocation5] sm:$0xff] %vm612, %v1440
        %1457 = vst.msk [vmem:[#allocation5 + $0x8] sm:$0xff] %vm612, %v1441
        %1458 = vst.msk [vmem:[#allocation5 + $0x10] sm:$0xff] %vm612, %v1442
        %1459 = vst.msk [vmem:[#allocation5 + $0x18] sm:$0xff] %vm612, %v1443
        %1460 = vst.msk [vmem:[#allocation5 + $0x20] sm:$0xff] %vm612, %v1444
        %1461 = vst.msk [vmem:[#allocation5 + $0x28] sm:$0xff] %vm612, %v1445
        %1462 = vst.msk [vmem:[#allocation5 + $0x30] sm:$0xff] %vm612, %v1446
        %1463 = vst.msk [vmem:[#allocation5 + $0x38] sm:$0xff] %vm612, %v1447
        %1464 = vst.msk [vmem:[#allocation5 + $0x40] sm:$0xff] %vm612, %v1448
        %1465 = vst.msk [vmem:[#allocation5 + $0x48] sm:$0xff] %vm612, %v1449
        %1466 = vst.msk [vmem:[#allocation5 + $0x50] sm:$0xff] %vm612, %v1450
        %1467 = vst.msk [vmem:[#allocation5 + $0x58] sm:$0xff] %vm612, %v1451
        %1468 = vst.msk [vmem:[#allocation5 + $0x60] sm:$0xff] %vm612, %v1452
        %1469 = vst.msk [vmem:[#allocation5 + $0x68] sm:$0xff] %vm612, %v1453
        %1470 = vst.msk [vmem:[#allocation5 + $0x70] sm:$0xff] %vm612, %v1454
        %1471 = vst.msk [vmem:[#allocation5 + $0x78] sm:$0xff] %vm612, %v1455
        %1472 = vst.msk [vmem:[#allocation3] sm:$0xff] %vm1204, %v932
        %1473 = vst.msk [vmem:[#allocation3 + $0x8] sm:$0xff] %vm1204, %v933
        %1474 = vst.msk [vmem:[#allocation3 + $0x10] sm:$0xff] %vm1204, %v934
        %1475 = vst.msk [vmem:[#allocation3 + $0x18] sm:$0xff] %vm1204, %v935
        %1476 = vst.msk [vmem:[#allocation3 + $0x20] sm:$0xff] %vm1204, %v936
        %1477 = vst.msk [vmem:[#allocation3 + $0x28] sm:$0xff] %vm1204, %v937
        %1478 = vst.msk [vmem:[#allocation3 + $0x30] sm:$0xff] %vm1204, %v938
        %1479 = vst.msk [vmem:[#allocation3 + $0x38] sm:$0xff] %vm1204, %v939
        %1480 = vst.msk [vmem:[#allocation3 + $0x40] sm:$0xff] %vm1204, %v940
        %1481 = vst.msk [vmem:[#allocation3 + $0x48] sm:$0xff] %vm1204, %v941
        %1482 = vst.msk [vmem:[#allocation3 + $0x50] sm:$0xff] %vm1204, %v942
        %1483 = vst.msk [vmem:[#allocation3 + $0x58] sm:$0xff] %vm1204, %v943
        %1484 = vst.msk [vmem:[#allocation3 + $0x60] sm:$0xff] %vm1204, %v944
        %1485 = vst.msk [vmem:[#allocation3 + $0x68] sm:$0xff] %vm1204, %v945
        %1486 = vst.msk [vmem:[#allocation3 + $0x70] sm:$0xff] %vm1204, %v946
        %1487 = vst.msk [vmem:[#allocation3 + $0x78] sm:$0xff] %vm1204, %v947
        %p1488 = scmp.eq.s32.totalorder %s37, 1
        // Predicated region
        $region69: #{tpu_custom_call.1} parent=55 // pred_check
          %p1489 = pneg %p1488
        $region70: #{tpu_custom_call.1} parent=55 // pred_check_branch
          %1491 = sbr.rel (%p1489) target = $region72
        $region71: #{tpu_custom_call.1} parent=55 // pred_region
          %v1492 = vld [vmem:[#allocation4] sm:$0xff]
          %v1493 = vld [vmem:[#allocation4 + $0x8] sm:$0xff]
          %v1494 = vld [vmem:[#allocation4 + $0x10] sm:$0xff]
          %v1495 = vld [vmem:[#allocation4 + $0x18] sm:$0xff]
          %v1496 = vld [vmem:[#allocation4 + $0x20] sm:$0xff]
          %v1497 = vld [vmem:[#allocation4 + $0x28] sm:$0xff]
          %v1498 = vld [vmem:[#allocation4 + $0x30] sm:$0xff]
          %v1499 = vld [vmem:[#allocation4 + $0x38] sm:$0xff]
          %v1500 = vld [vmem:[#allocation4 + $0x40] sm:$0xff]
          %v1501 = vld [vmem:[#allocation4 + $0x48] sm:$0xff]
          %v1502 = vld [vmem:[#allocation4 + $0x50] sm:$0xff]
          %v1503 = vld [vmem:[#allocation4 + $0x58] sm:$0xff]
          %v1504 = vld [vmem:[#allocation4 + $0x60] sm:$0xff]
          %v1505 = vld [vmem:[#allocation4 + $0x68] sm:$0xff]
          %v1506 = vld [vmem:[#allocation4 + $0x70] sm:$0xff]
          %v1507 = vld [vmem:[#allocation4 + $0x78] sm:$0xff]
          %v1508 = vrcp.pop %v1492
          %v1509 = vrcp.pop %v1493
          %v1510 = vrcp.pop %v1494
          %v1511 = vrcp.pop %v1495
          %v1512 = vrcp.pop %v1496
          %v1513 = vrcp.pop %v1497
          %v1514 = vrcp.pop %v1498
          %v1515 = vrcp.pop %v1499
          %v1516 = vrcp.pop %v1500
          %v1517 = vrcp.pop %v1501
          %v1518 = vrcp.pop %v1502
          %v1519 = vrcp.pop %v1503
          %v1520 = vrcp.pop %v1504
          %v1521 = vrcp.pop %v1505
          %v1522 = vrcp.pop %v1506
          %v1523 = vrcp.pop %v1507
          %v1524 = vld [vmem:[#allocation5] sm:$0xff]
          %v1525 = vld [vmem:[#allocation5 + $0x8] sm:$0xff]
          %v1526 = vld [vmem:[#allocation5 + $0x10] sm:$0xff]
          %v1527 = vld [vmem:[#allocation5 + $0x18] sm:$0xff]
          %v1528 = vld [vmem:[#allocation5 + $0x20] sm:$0xff]
          %v1529 = vld [vmem:[#allocation5 + $0x28] sm:$0xff]
          %v1530 = vld [vmem:[#allocation5 + $0x30] sm:$0xff]
          %v1531 = vld [vmem:[#allocation5 + $0x38] sm:$0xff]
          %v1532 = vld [vmem:[#allocation5 + $0x40] sm:$0xff]
          %v1533 = vld [vmem:[#allocation5 + $0x48] sm:$0xff]
          %v1534 = vld [vmem:[#allocation5 + $0x50] sm:$0xff]
          %v1535 = vld [vmem:[#allocation5 + $0x58] sm:$0xff]
          %v1536 = vld [vmem:[#allocation5 + $0x60] sm:$0xff]
          %v1537 = vld [vmem:[#allocation5 + $0x68] sm:$0xff]
          %v1538 = vld [vmem:[#allocation5 + $0x70] sm:$0xff]
          %v1539 = vld [vmem:[#allocation5 + $0x78] sm:$0xff]
          %1541 = vset.pattern.permute.xlu0 0
          %1542 = vperm.xlu0 %1541, %v1508
          %v1543 = vpop.permute.xlu0 %1542
          %1546 = vset.pattern.permute.xlu0 0
          %1547 = vperm.xlu0 %1546, %v1509
          %v1548 = vpop.permute.xlu0 %1547
          %1551 = vset.pattern.permute.xlu0 0
          %1552 = vperm.xlu0 %1551, %v1510
          %v1553 = vpop.permute.xlu0 %1552
          %1556 = vset.pattern.permute.xlu0 0
          %1557 = vperm.xlu0 %1556, %v1511
          %v1558 = vpop.permute.xlu0 %1557
          %1561 = vset.pattern.permute.xlu0 0
          %1562 = vperm.xlu0 %1561, %v1512
          %v1563 = vpop.permute.xlu0 %1562
          %1566 = vset.pattern.permute.xlu0 0
          %1567 = vperm.xlu0 %1566, %v1513
          %v1568 = vpop.permute.xlu0 %1567
          %1571 = vset.pattern.permute.xlu0 0
          %1572 = vperm.xlu0 %1571, %v1514
          %v1573 = vpop.permute.xlu0 %1572
          %1576 = vset.pattern.permute.xlu0 0
          %1577 = vperm.xlu0 %1576, %v1515
          %v1578 = vpop.permute.xlu0 %1577
          %1581 = vset.pattern.permute.xlu0 0
          %1582 = vperm.xlu0 %1581, %v1516
          %v1583 = vpop.permute.xlu0 %1582
          %1586 = vset.pattern.permute.xlu0 0
          %1587 = vperm.xlu0 %1586, %v1517
          %v1588 = vpop.permute.xlu0 %1587
          %1591 = vset.pattern.permute.xlu0 0
          %1592 = vperm.xlu0 %1591, %v1518
          %v1593 = vpop.permute.xlu0 %1592
          %1596 = vset.pattern.permute.xlu0 0
          %1597 = vperm.xlu0 %1596, %v1519
          %v1598 = vpop.permute.xlu0 %1597
          %1601 = vset.pattern.permute.xlu0 0
          %1602 = vperm.xlu0 %1601, %v1520
          %v1603 = vpop.permute.xlu0 %1602
          %1606 = vset.pattern.permute.xlu0 0
          %1607 = vperm.xlu0 %1606, %v1521
          %v1608 = vpop.permute.xlu0 %1607
          %1611 = vset.pattern.permute.xlu0 0
          %1612 = vperm.xlu0 %1611, %v1522
          %v1613 = vpop.permute.xlu0 %1612
          %1616 = vset.pattern.permute.xlu0 0
          %1617 = vperm.xlu0 %1616, %v1523
          %v1618 = vpop.permute.xlu0 %1617
          %v1620 = vmul.f32 %v1524, %v1543
          %v1621 = vmul.f32 %v1525, %v1548
          %v1622 = vmul.f32 %v1526, %v1553
          %v1623 = vmul.f32 %v1527, %v1558
          %v1624 = vmul.f32 %v1528, %v1563
          %v1625 = vmul.f32 %v1529, %v1568
          %v1626 = vmul.f32 %v1530, %v1573
          %v1627 = vmul.f32 %v1531, %v1578
          %v1628 = vmul.f32 %v1532, %v1583
          %v1629 = vmul.f32 %v1533, %v1588
          %v1630 = vmul.f32 %v1534, %v1593
          %v1631 = vmul.f32 %v1535, %v1598
          %v1632 = vmul.f32 %v1536, %v1603
          %v1633 = vmul.f32 %v1537, %v1608
          %v1634 = vmul.f32 %v1538, %v1613
          %v1635 = vmul.f32 %v1539, %v1618
          %1636 = vxpose.xlu0.b32.start [1/16] %v1620, 128
          %1637 = vxpose.xlu0.b32.cont [2/16] %v1621, 128
          %1638 = vxpose.xlu0.b32.cont [3/16] %v1622, 128
          %1639 = vxpose.xlu0.b32.cont [4/16] %v1623, 128
          %1640 = vxpose.xlu0.b32.cont [5/16] %v1624, 128
          %1641 = vxpose.xlu0.b32.cont [6/16] %v1625, 128
          %1642 = vxpose.xlu0.b32.cont [7/16] %v1626, 128
          %1643 = vxpose.xlu0.b32.cont [8/16] %v1627, 128
          %1644 = vxpose.xlu0.b32.cont [9/16] %v1628, 128
          %1645 = vxpose.xlu0.b32.cont [10/16] %v1629, 128
          %1646 = vxpose.xlu0.b32.cont [11/16] %v1630, 128
          %1647 = vxpose.xlu0.b32.cont [12/16] %v1631, 128
          %1648 = vxpose.xlu0.b32.cont [13/16] %v1632, 128
          %1649 = vxpose.xlu0.b32.cont [14/16] %v1633, 128
          %1650 = vxpose.xlu0.b32.cont [15/16] %v1634, 128
          %1651 = vxpose.xlu0.b32.end [16/16] %v1635, 128
          %v1652 = vpop.trf.xlu0
          %v1653 = vpop.trf.xlu0
          %v1654 = vpop.trf.xlu0
          %v1655 = vpop.trf.xlu0
          %v1656 = vpop.trf.xlu0
          %v1657 = vpop.trf.xlu0
          %v1658 = vpop.trf.xlu0
          %v1659 = vpop.trf.xlu0
          %v1660 = vpop.trf.xlu0
          %v1661 = vpop.trf.xlu0
          %v1662 = vpop.trf.xlu0
          %v1663 = vpop.trf.xlu0
          %v1664 = vpop.trf.xlu0
          %v1665 = vpop.trf.xlu0
          %v1666 = vpop.trf.xlu0
          %v1667 = vpop.trf.xlu0
          %s1668 = sld [smem:[#allocation6]]
          %v1669 = vstv %s1668
          %v1670 = vmul.f32 %v1669, %v1652
          %v1671 = vmul.f32 %v1669, %v1653
          %v1672 = vmul.f32 %v1669, %v1654
          %v1673 = vmul.f32 %v1669, %v1655
          %v1674 = vld [vmem:[%s370] sm:$0xf]
          %v1675 = vld [vmem:[%s370 + $0x4] sm:$0xf]
          %v1676 = vld [vmem:[%s370 + $0x8] sm:$0xf]
          %v1677 = vld [vmem:[%s370 + $0xc] sm:$0xf]
          %v1678 = vunpack.c.l.bf16 %v1674
          %v1679 = vunpack.c.l.bf16 %v1675
          %v1680 = vunpack.c.l.bf16 %v1676
          %v1681 = vunpack.c.l.bf16 %v1677
          %v1682 = vadd.f32 %v1670, %v1678
          %v1683 = vadd.f32 %v1671, %v1679
          %v1684 = vadd.f32 %v1672, %v1680
          %v1685 = vadd.f32 %v1673, %v1681
          %1686 = vst [vmem:[%s418] sm:$0xff] %v1682
          %1687 = vst [vmem:[%s418 + $0x8] sm:$0xff] %v1683
          %1688 = vst [vmem:[%s418 + $0x10] sm:$0xff] %v1684
          %1689 = vst [vmem:[%s418 + $0x18] sm:$0xff] %v1685
        $region72: #{tpu_custom_call.1} parent=55 // pred_fallthru
          _
        %s1690 = sand.u32 %s262, 1
        %s1691 = scalar_lea.sflag [#allocation9], %s1690
        %s1692 = sand.u32 %s262, 1
        %s1693 = smul.addr %s1692, 32
        %s1694 = scalar_lea.vmem [#allocation12], %s1693
        // Predicated region
        $region73: #{tpu_custom_call.1} parent=55 // pred_check
          %p1695 = pneg %p272
        $region74: #{tpu_custom_call.1} parent=55 // pred_check_branch
          %1697 = sbr.rel (%p1695) target = $region76
        $region75: #{tpu_custom_call.1} parent=55 // pred_region
          %s1699 = ssub.s32 512, 512
          %1700 = vsyncadd %s1691, %s1699
          %s1701 = smul.addr %s35, 8
          %s1702 = sadd.s32 %s36, %s1701
          %s1703 = smul.addr %s1702, 128
          %s1704 = scalar_lea.hbm %s9, %s1703
          %s1705 = sshll.u32 %s1694, 4
          %s1706 = int_to_ptr.vmem [resolvable:$true] %s1705
          %1711 = dma.vmem_to_hbm [thread:$0]  %s1706, 512, %s1704, %s1691, 128, 256, 8
        $region76: #{tpu_custom_call.1} parent=55 // pred_fallthru
          _
      $region56: #{tpu_custom_call.1} parent=5 // pred_fallthru
        _
      %p1712 = scmp.le.s32.totalorder 2, %s25
      // Predicated region
      $region77: #{tpu_custom_call.1} parent=5 // pred_check
        %p1713 = pneg %p1712
      $region78: #{tpu_custom_call.1} parent=5 // pred_check_branch
        %1715 = sbr.rel (%p1713) target = $region80
      $region79: #{tpu_custom_call.1} parent=5 // pred_region
        %s1716 = ssub.s32 %s25, 2
        // Predicated region
        $region81: #{tpu_custom_call.1} parent=79 // pred_check
          %p1717 = pneg %p278
        $region82: #{tpu_custom_call.1} parent=79 // pred_check_branch
          %1719 = sbr.rel (%p1717) target = $region84
        $region83: #{tpu_custom_call.1} parent=79 // pred_region
          %s1720 = sand.u32 %s263, 1
          %s1721 = scalar_lea.sflag [#allocation9], %s1720
          %s1722 = sand.u32 %s263, 1
          %s1723 = smul.addr %s1722, 32
          %s1724 = scalar_lea.vmem [#allocation12], %s1723
          %1725 = dma.done %s1721, 512
        $region84: #{tpu_custom_call.1} parent=79 // pred_fallthru
          _
      $region80: #{tpu_custom_call.1} parent=5 // pred_fallthru
        _
    $region6: #{tpu_custom_call.1} parent=1 // loop_footer
      %s29 = sadd.s32 1, %s25
    $region7: #{tpu_custom_call.1} parent=1 // loop_footer_branch
      %24 = sbr.rel target = $region3
    $region8: #{tpu_custom_call.1} parent=1 // loop_exit
      _
    %1726 = vsyncpa [#allocation8], 1
    %s1727 = scalar_lea.sflag [#allocation8], 1
    %1728 = vsyncpa %s1727, 1
    %1729 = vsyncpa [#allocation11], 1
    %s1730 = scalar_lea.sflag [#allocation11], 1
    %1731 = vsyncpa %s1730, 1
    %1732 = vsyncpa [#allocation9], 1
    %s1733 = scalar_lea.sflag [#allocation9], 1
    %1734 = vsyncpa %s1733, 1

</llo_original>
